<compile_context>
chip_gen: v5e
topology: v5e:2x2
jax: 0.10.0
libtpu: 0.0.40
codegen_flags: <defaults>
</compile_context>

<pallas_src>
import functools
import math

import jax
import jax.numpy as jnp
from jax import lax
from jax.experimental import pallas as pl
from jax.experimental.pallas import tpu as pltpu

LN_EPS = 1e-12

# ---- vector-table row layout (shared by wrapper and kernel) ---------------- #
_ROW_EMB_LN_G = 0
_ROW_EMB_LN_B = 1
_ROW_FIT_B = 2
_ROW_MASK0 = 3              # `batch` rows of additive mask bias follow
_ROWS_PER_LAYER = 8         # qkv_b, ao_b, ln1_g, ln1_b, i_b, o_b, ln2_g, ln2_b


def _layer_row_base(layer, batch):
    return _ROW_MASK0 + batch + _ROWS_PER_LAYER * layer


# ------------------------------ fused kernel ------------------------------- #

def _fused_forward_kernel(emb_ref, vec_ref, fitw_ref, qkvw_ref, aow_ref,
                          iw_ref, ow_ref, hid_ref, score_ref, fit_ref,
                          *, num_heads, batch, seq, eps, use_fit):
    """Single-invocation fused TinyBERT forward.

    Inputs:
      emb_ref  [M, H]        pre-summed tok+pos+seg embeddings (M = batch*seq)
      vec_ref  [N, W]        packed vector table (LN params, biases, mask bias)
      fitw_ref [H, F]        fit_dense weight
      qkvw_ref [L, H, 3H]    fused Q/K/V weights
      aow_ref  [L, H, H]     attention output projection
      iw_ref   [L, H, I]     FFN intermediate weight
      ow_ref   [L, I, H]     FFN output weight
    Outputs:
      hid_ref   [M, H]               final hidden states
      score_ref [L*B*nH, S, S]       masked PRE-softmax attention scores
      fit_ref   [(L+1)*M, F]         fit_dense of embeddings + each layer output
    """
    num_layers = qkvw_ref.shape[0]
    M, H = emb_ref.shape
    I = iw_ref.shape[2]
    F = fit_ref.shape[1]
    dh = H // num_heads
    scale = 1.0 / math.sqrt(dh)
    inv_sqrt2 = 1.0 / math.sqrt(2.0)

    def vrow(r, w):
        return vec_ref[r:r + 1, :w]                       # [1, w]

    def layernorm(x, g, b):
        mu = jnp.mean(x, axis=-1, keepdims=True)
        var = jnp.mean(jnp.square(x - mu), axis=-1, keepdims=True)
        return (x - mu) * lax.rsqrt(var + eps) * g + b

    fit_w = fitw_ref[...] if use_fit else None
    fit_b = vrow(_ROW_FIT_B, F) if use_fit else None

    def write_fit(idx, hv):
        if use_fit:
            fit_ref[idx * M:(idx + 1) * M, :] = (
                jnp.dot(hv, fit_w, preferred_element_type=jnp.float32) + fit_b)
        else:
            fit_ref[idx * M:(idx + 1) * M, :] = hv

    # ---- embeddings: (gather + sum done in wrapper) -> LayerNorm ----
    h = layernorm(emb_ref[...], vrow(_ROW_EMB_LN_G, H), vrow(_ROW_EMB_LN_B, H))
    write_fit(0, h)

    # ---- additive attention-mask bias rows, hoisted out of all loops ----
    mask_bias = [vrow(_ROW_MASK0 + b, seq) for b in range(batch)]     # [1, S]

    # ---- transformer layers ----
    for l in range(num_layers):
        base = _layer_row_base(l, batch)
        qkv_b = vrow(base + 0, 3 * H)
        ao_b = vrow(base + 1, H)
        ln1_g = vrow(base + 2, H)
        ln1_b = vrow(base + 3, H)
        i_b = vrow(base + 4, I)
        o_b = vrow(base + 5, H)
        ln2_g = vrow(base + 6, H)
        ln2_b = vrow(base + 7, H)

        # One wide QKV projection for all rows: [M,H] @ [H,3H].
        qkv = jnp.dot(h, qkvw_ref[l], preferred_element_type=jnp.float32) + qkv_b

        ctx_rows = []
        for b in range(batch):
            rows = slice(b * seq, (b + 1) * seq)
            q_b = qkv[rows, 0:H]                          # [S, H]
            k_b = qkv[rows, H:2 * H]
            v_b = qkv[rows, 2 * H:3 * H]
            head_ctx = []
            for hd in range(num_heads):
                cols = slice(hd * dh, (hd + 1) * dh)
                q = q_b[:, cols]                          # [S, dh]
                k = k_b[:, cols]
                v = v_b[:, cols]
                # q @ k^T without an explicit transpose (contract last dims).
                s = lax.dot_general(q, k, (((1,), (1,)), ((), ())),
                                    preferred_element_type=jnp.float32)
                s = s * scale + mask_bias[b]
                score_ref[(l * batch + b) * num_heads + hd] = s   # pre-softmax
                m = jnp.max(s, axis=-1, keepdims=True)
                e = jnp.exp(s - m)
                p = e * pl.reciprocal(jnp.sum(e, axis=-1, keepdims=True),
                                      approx=True)
                head_ctx.append(jnp.dot(p, v, preferred_element_type=jnp.float32))
            ctx_rows.append(jnp.concatenate(head_ctx, axis=-1))    # [S, H]
        ctx = jnp.concatenate(ctx_rows, axis=0)                    # [M, H]

        # Single fused output projection with the original [H, H] weight.
        attn_out = jnp.dot(ctx, aow_ref[l], preferred_element_type=jnp.float32) + ao_b
        h1 = layernorm(attn_out + h, ln1_g, ln1_b)

        # Feed-forward: GELU(erf) -> output proj -> residual LayerNorm.
        inter = jnp.dot(h1, iw_ref[l], preferred_element_type=jnp.float32) + i_b
        inter = 0.5 * inter * (1.0 + lax.erf(inter * inv_sqrt2))
        ffn = jnp.dot(inter, ow_ref[l], preferred_element_type=jnp.float32) + o_b
        h = layernorm(ffn + h1, ln2g := ln2_g, ln2_b) if False else layernorm(ffn + h1, ln2_g, ln2_b)

        write_fit(l + 1, h)

    hid_ref[...] = h


# ----------------------------- model forward ------------------------------- #

def tiny_bert_forward(params, token_ids, segment_ids, position_ids, attn_mask, cfg):
    B, S = token_ids.shape
    H = cfg["hidden_size"]
    nH = cfg["num_heads"]
    I = cfg["intermediate_size"]
    L = cfg["num_layers"]
    use_fit = cfg["use_fit_dense"]
    F = cfg["fit_size"] if use_fit else H
    M = B * S

    # Embedding gathers + sum stay in plain-JAX glue; everything else in-kernel.
    emb_sum = (jnp.take(params["tok_emb"], token_ids, axis=0)
               + jnp.take(params["pos_emb"], position_ids, axis=0)
               + jnp.take(params["seg_emb"], segment_ids, axis=0)).reshape(M, H)

    # --- pack every small vector into one table (one DMA) --- #
    W = max(3 * H, I, F, S)

    def row(v):
        v = jnp.asarray(v, jnp.float32).reshape(1, -1)
        return jnp.pad(v, ((0, 0), (0, W - v.shape[1])))

    mask_bias = (1.0 - attn_mask.astype(jnp.float32)) * -10000.0     # [B, S]

    rows = [row(params["emb_ln_g"]), row(params["emb_ln_b"]),
            row(params["fit_b"] if use_fit else jnp.zeros((F,), jnp.float32))]
    rows += [row(mask_bias[b]) for b in range(B)]
    for p in params["layers"]:
        rows += [row(jnp.concatenate([p["q_b"], p["k_b"], p["v_b"]])),
                 row(p["ao_b"]),
                 row(p["ln1_g"]), row(p["ln1_b"]),
                 row(p["i_b"]),
                 row(p["o_b"]),
                 row(p["ln2_g"]), row(p["ln2_b"])]
    vec_table = jnp.concatenate(rows, axis=0)                        # [N, W]

    # --- per-class stacked weights --- #
    qkv_w = jnp.stack([jnp.concatenate([p["q_w"], p["k_w"], p["v_w"]], axis=1)
                       for p in params["layers"]])                   # [L, H, 3H]
    ao_w = jnp.stack([p["ao_w"] for p in params["layers"]])          # [L, H, H]
    i_w = jnp.stack([p["i_w"] for p in params["layers"]])            # [L, H, I]
    o_w = jnp.stack([p["o_w"] for p in params["layers"]])            # [L, I, H]
    fit_w = params["fit_w"] if use_fit else jnp.zeros((H, H), jnp.float32)

    out_shape = (
        jax.ShapeDtypeStruct((M, H), jnp.float32),                   # hidden
        jax.ShapeDtypeStruct((L * B * nH, S, S), jnp.float32),       # scores slab
        jax.ShapeDtypeStruct(((L + 1) * M, F), jnp.float32),         # fit slab
    )

    kernel = functools.partial(
        _fused_forward_kernel, num_heads=nH, batch=B, seq=S,
        eps=LN_EPS, use_fit=use_fit)

    vmem = pl.BlockSpec(memory_space=pltpu.MemorySpace.VMEM)
    hid, scores, fit_slab = pl.pallas_call(
        kernel,
        out_shape=out_shape,
        in_specs=[vmem] * 7,
        out_specs=(vmem, vmem, vmem),
    )(emb_sum, vec_table, fit_w, qkv_w, ao_w, i_w, o_w)

    output = hid.reshape(B, S, H)                    # use_lm=False -> no lm_head
    scores = scores.reshape(L, B, nH, S, S)
    all_attn_outputs = [scores[l] for l in range(L)]
    all_ffn_outputs = [fit_slab[i * M:(i + 1) * M].reshape(B, S, F)
                       for i in range(L + 1)]
    return output, all_attn_outputs, all_ffn_outputs


# ----------------------------- parameter init ------------------------------ #

def init_params(key, cfg):
    std = 0.02
    H, I = cfg["hidden_size"], cfg["intermediate_size"]
    keys = iter(jax.random.split(key, 64))

    def nrm(shape):
        return jax.random.normal(next(keys), shape, jnp.float32) * std

    params = {
        "tok_emb": nrm((cfg["vocab_size"], H)),
        "pos_emb": nrm((cfg["max_position"], H)),
        "seg_emb": nrm((cfg["type_vocab_size"], H)),
        "emb_ln_g": jnp.ones((H,), jnp.float32),
        "emb_ln_b": jnp.zeros((H,), jnp.float32),
        "fit_w": nrm((H, cfg["fit_size"])),
        "fit_b": jnp.zeros((cfg["fit_size"],), jnp.float32),
        "layers": [],
    }
    for _ in range(cfg["num_layers"]):
        params["layers"].append({
            "q_w": nrm((H, H)), "q_b": jnp.zeros((H,), jnp.float32),
            "k_w": nrm((H, H)), "k_b": jnp.zeros((H,), jnp.float32),
            "v_w": nrm((H, H)), "v_b": jnp.zeros((H,), jnp.float32),
            "ao_w": nrm((H, H)), "ao_b": jnp.zeros((H,), jnp.float32),
            "ln1_g": jnp.ones((H,), jnp.float32),
            "ln1_b": jnp.zeros((H,), jnp.float32),
            "i_w": nrm((H, I)), "i_b": jnp.zeros((I,), jnp.float32),
            "o_w": nrm((I, H)), "o_b": jnp.zeros((H,), jnp.float32),
            "ln2_g": jnp.ones((H,), jnp.float32),
            "ln2_b": jnp.zeros((H,), jnp.float32),
        })
    return params


# --------------------------------- driver ----------------------------------- #

if __name__ == "__main__":
    cfg = dict(
        vocab_size=100,
        hidden_size=32,
        num_heads=2,
        intermediate_size=64,
        num_layers=2,
        max_position=32,
        type_vocab_size=2,
        fit_size=48,
        use_fit_dense=True,
    )

    key = jax.random.PRNGKey(0)
    k_param, k_tok, k_seg = jax.random.split(key, 3)

    B, S = 2, 8
    params = init_params(k_param, cfg)

    token_ids = jax.random.randint(k_tok, (B, S), 0, cfg["vocab_size"], jnp.int32)
    segment_ids = jax.random.randint(k_seg, (B, S), 0, cfg["type_vocab_size"], jnp.int32)
    position_ids = jnp.broadcast_to(jnp.arange(S, dtype=jnp.int32), (B, S))
    # batch 1 has 2 padded positions at the end
    attn_mask = jnp.array([[1] * S, [1] * (S - 2) + [0] * 2], dtype=jnp.int32)

    @jax.jit
    def run(params, token_ids, segment_ids, position_ids, attn_mask):
        return tiny_bert_forward(params, token_ids, segment_ids, position_ids,
                                 attn_mask, cfg)

    output, all_attn, all_ffn = run(params, token_ids, segment_ids,
                                    position_ids, attn_mask)
    jax.block_until_ready((output, all_attn, all_ffn))

    assert output.shape == (B, S, cfg["hidden_size"])
    assert len(all_attn) == cfg["num_layers"]
    assert all(a.shape == (B, cfg["num_heads"], S, S) for a in all_attn)
    assert len(all_ffn) == cfg["num_layers"] + 1
    assert all(f.shape == (B, S, cfg["fit_size"]) for f in all_ffn)

    print("KERNEL_OK")
</pallas_src>

<mosaic_0001>
module attributes {stable_mosaic.version = 11 : i64} {
  func.func @_fused_forward_kernel(%arg0: memref<16x32xf32, #tpu.memory_space<vmem>>, %arg1: memref<21x96xf32, #tpu.memory_space<vmem>>, %arg2: memref<32x48xf32, #tpu.memory_space<vmem>>, %arg3: memref<2x32x96xf32, #tpu.memory_space<vmem>>, %arg4: memref<2x32x32xf32, #tpu.memory_space<vmem>>, %arg5: memref<2x32x64xf32, #tpu.memory_space<vmem>>, %arg6: memref<2x64x32xf32, #tpu.memory_space<vmem>>, %arg7: memref<16x32xf32, #tpu.memory_space<vmem>>, %arg8: memref<8x8x8xf32, #tpu.memory_space<vmem>>, %arg9: memref<48x48xf32, #tpu.memory_space<vmem>>) attributes {dimension_semantics = [], scalar_prefetch = 0 : i64, scratch_operands = 0 : i64, tpu.core_type = #tpu.core_type<tc>} {
    %c0 = arith.constant 0 : index
    %c0_0 = arith.constant 0 : index
    %0 = vector.load %arg2[%c0, %c0_0] : memref<32x48xf32, #tpu.memory_space<vmem>>, vector<32x48xf32>
    %c2 = arith.constant 2 : index
    %c0_1 = arith.constant 0 : index
    %1 = vector.load %arg1[%c2, %c0_1] : memref<21x96xf32, #tpu.memory_space<vmem>>, vector<1x48xf32>
    %c0_2 = arith.constant 0 : index
    %c0_3 = arith.constant 0 : index
    %2 = vector.load %arg0[%c0_2, %c0_3] : memref<16x32xf32, #tpu.memory_space<vmem>>, vector<16x32xf32>
    %c0_4 = arith.constant 0 : index
    %c0_5 = arith.constant 0 : index
    %3 = vector.load %arg1[%c0_4, %c0_5] : memref<21x96xf32, #tpu.memory_space<vmem>>, vector<1x32xf32>
    %c1 = arith.constant 1 : index
    %c0_6 = arith.constant 0 : index
    %4 = vector.load %arg1[%c1, %c0_6] : memref<21x96xf32, #tpu.memory_space<vmem>>, vector<1x32xf32>
    %cst = arith.constant dense<0.000000e+00> : vector<16xf32>
    %5 = vector.multi_reduction <add>, %2, %cst [1] : vector<16x32xf32> to vector<16xf32>
    %6 = vector.shape_cast %5 : vector<16xf32> to vector<16x1xf32>
    %cst_7 = arith.constant 3.200000e+01 : f32
    %7 = vector.broadcast %cst_7 : f32 to vector<16x1xf32>
    %8 = arith.divf %6, %7 : vector<16x1xf32>
    %9 = vector.broadcast %8 : vector<16x1xf32> to vector<16x32xf32>
    %10 = arith.subf %2, %9 : vector<16x32xf32>
    %11 = arith.mulf %10, %10 : vector<16x32xf32>
    %cst_8 = arith.constant dense<0.000000e+00> : vector<16xf32>
    %12 = vector.multi_reduction <add>, %11, %cst_8 [1] : vector<16x32xf32> to vector<16xf32>
    %13 = vector.shape_cast %12 : vector<16xf32> to vector<16x1xf32>
    %cst_9 = arith.constant 3.200000e+01 : f32
    %14 = vector.broadcast %cst_9 : f32 to vector<16x1xf32>
    %15 = arith.divf %13, %14 : vector<16x1xf32>
    %16 = vector.broadcast %8 : vector<16x1xf32> to vector<16x32xf32>
    %17 = arith.subf %2, %16 : vector<16x32xf32>
    %cst_10 = arith.constant 9.99999996E-13 : f32
    %18 = vector.broadcast %cst_10 : f32 to vector<16x1xf32>
    %19 = arith.addf %15, %18 : vector<16x1xf32>
    %20 = math.rsqrt %19 : vector<16x1xf32>
    %21 = vector.broadcast %20 : vector<16x1xf32> to vector<16x32xf32>
    %22 = arith.mulf %17, %21 : vector<16x32xf32>
    %23 = vector.broadcast %3 : vector<1x32xf32> to vector<16x32xf32>
    %24 = arith.mulf %22, %23 : vector<16x32xf32>
    %25 = vector.broadcast %4 : vector<1x32xf32> to vector<16x32xf32>
    %26 = arith.addf %24, %25 : vector<16x32xf32>
    %cst_11 = arith.constant dense<0.000000e+00> : vector<16x48xf32>
    %27 = tpu.matmul %26, %0, %cst_11 {dimension_numbers = #tpu.dot_dimension_numbers<[1], [0], [0], [1], [0, 0, 1, 1], [], []>} : vector<16x32xf32>, vector<32x48xf32>, vector<16x48xf32> -> vector<16x48xf32>
    %28 = vector.broadcast %1 : vector<1x48xf32> to vector<16x48xf32>
    %29 = arith.addf %27, %28 : vector<16x48xf32>
    %c0_12 = arith.constant 0 : index
    %c0_13 = arith.constant 0 : index
    %30 = vector.load %arg9[%c0_12, %c0_13] : memref<48x48xf32, #tpu.memory_space<vmem>>, vector<16x48xf32>
    tpu.vector_store %arg9[%c0_12, %c0_13], %29 {strides = array<i32>} : memref<48x48xf32, #tpu.memory_space<vmem>>, vector<16x48xf32>,
    %c3 = arith.constant 3 : index
    %c0_14 = arith.constant 0 : index
    %31 = vector.load %arg1[%c3, %c0_14] : memref<21x96xf32, #tpu.memory_space<vmem>>, vector<1x8xf32>
    %c4 = arith.constant 4 : index
    %c0_15 = arith.constant 0 : index
    %32 = vector.load %arg1[%c4, %c0_15] : memref<21x96xf32, #tpu.memory_space<vmem>>, vector<1x8xf32>
    %c5 = arith.constant 5 : index
    %c0_16 = arith.constant 0 : index
    %33 = vector.load %arg1[%c5, %c0_16] : memref<21x96xf32, #tpu.memory_space<vmem>>, vector<1x96xf32>
    %c6 = arith.constant 6 : index
    %c0_17 = arith.constant 0 : index
    %34 = vector.load %arg1[%c6, %c0_17] : memref<21x96xf32, #tpu.memory_space<vmem>>, vector<1x32xf32>
    %c7 = arith.constant 7 : index
    %c0_18 = arith.constant 0 : index
    %35 = vector.load %arg1[%c7, %c0_18] : memref<21x96xf32, #tpu.memory_space<vmem>>, vector<1x32xf32>
    %c8 = arith.constant 8 : index
    %c0_19 = arith.constant 0 : index
    %36 = vector.load %arg1[%c8, %c0_19] : memref<21x96xf32, #tpu.memory_space<vmem>>, vector<1x32xf32>
    %c9 = arith.constant 9 : index
    %c0_20 = arith.constant 0 : index
    %37 = vector.load %arg1[%c9, %c0_20] : memref<21x96xf32, #tpu.memory_space<vmem>>, vector<1x64xf32>
    %c10 = arith.constant 10 : index
    %c0_21 = arith.constant 0 : index
    %38 = vector.load %arg1[%c10, %c0_21] : memref<21x96xf32, #tpu.memory_space<vmem>>, vector<1x32xf32>
    %c11 = arith.constant 11 : index
    %c0_22 = arith.constant 0 : index
    %39 = vector.load %arg1[%c11, %c0_22] : memref<21x96xf32, #tpu.memory_space<vmem>>, vector<1x32xf32>
    %c12 = arith.constant 12 : index
    %c0_23 = arith.constant 0 : index
    %40 = vector.load %arg1[%c12, %c0_23] : memref<21x96xf32, #tpu.memory_space<vmem>>, vector<1x32xf32>
    %c0_24 = arith.constant 0 : index
    %c0_25 = arith.constant 0 : index
    %c0_26 = arith.constant 0 : index
    %41 = vector.load %arg3[%c0_24, %c0_25, %c0_26] : memref<2x32x96xf32, #tpu.memory_space<vmem>>, vector<1x32x96xf32>
    %42 = vector.shape_cast %41 : vector<1x32x96xf32> to vector<32x96xf32>
    %cst_27 = arith.constant dense<0.000000e+00> : vector<16x96xf32>
    %43 = tpu.matmul %26, %42, %cst_27 {dimension_numbers = #tpu.dot_dimension_numbers<[1], [0], [0], [1], [0, 0, 1, 1], [], []>} : vector<16x32xf32>, vector<32x96xf32>, vector<16x96xf32> -> vector<16x96xf32>
    %44 = vector.broadcast %33 : vector<1x96xf32> to vector<16x96xf32>
    %45 = arith.addf %43, %44 : vector<16x96xf32>
    %46 = vector.extract_strided_slice %45 {offsets = [0, 0], sizes = [8, 32], strides = [1, 1]} : vector<16x96xf32> to vector<8x32xf32>
    %47 = vector.extract_strided_slice %45 {offsets = [0, 32], sizes = [8, 32], strides = [1, 1]} : vector<16x96xf32> to vector<8x32xf32>
    %48 = vector.extract_strided_slice %45 {offsets = [0, 64], sizes = [8, 32], strides = [1, 1]} : vector<16x96xf32> to vector<8x32xf32>
    %49 = vector.extract_strided_slice %46 {offsets = [0, 0], sizes = [8, 16], strides = [1, 1]} : vector<8x32xf32> to vector<8x16xf32>
    %50 = vector.extract_strided_slice %47 {offsets = [0, 0], sizes = [8, 16], strides = [1, 1]} : vector<8x32xf32> to vector<8x16xf32>
    %51 = vector.extract_strided_slice %48 {offsets = [0, 0], sizes = [8, 16], strides = [1, 1]} : vector<8x32xf32> to vector<8x16xf32>
    %cst_28 = arith.constant dense<0.000000e+00> : vector<8x8xf32>
    %52 = tpu.matmul %49, %50, %cst_28 {dimension_numbers = #tpu.dot_dimension_numbers<[1], [1], [0], [0], [0, 0, 1, 0], [], []>} : vector<8x16xf32>, vector<8x16xf32>, vector<8x8xf32> -> vector<8x8xf32>
    %cst_29 = arith.constant 2.500000e-01 : f32
    %53 = vector.broadcast %cst_29 : f32 to vector<8x8xf32>
    %54 = arith.mulf %52, %53 : vector<8x8xf32>
    %55 = vector.broadcast %31 : vector<1x8xf32> to vector<8x8xf32>
    %56 = arith.addf %54, %55 : vector<8x8xf32>
    %c0_30 = arith.constant 0 : index
    %c0_31 = arith.constant 0 : index
    %c0_32 = arith.constant 0 : index
    %57 = vector.load %arg8[%c0_30, %c0_31, %c0_32] : memref<8x8x8xf32, #tpu.memory_space<vmem>>, vector<1x8x8xf32>
    %58 = vector.shape_cast %57 : vector<1x8x8xf32> to vector<8x8xf32>
    %59 = vector.shape_cast %56 : vector<8x8xf32> to vector<1x8x8xf32>
    tpu.vector_store %arg8[%c0_30, %c0_31, %c0_32], %59 {strides = array<i32>} : memref<8x8x8xf32, #tpu.memory_space<vmem>>, vector<1x8x8xf32>,
    %cst_33 = arith.constant dense<0xFF800000> : vector<8xf32>
    %60 = vector.multi_reduction <maximumf>, %56, %cst_33 [1] : vector<8x8xf32> to vector<8xf32>
    %61 = vector.shape_cast %60 : vector<8xf32> to vector<8x1xf32>
    %62 = vector.broadcast %61 : vector<8x1xf32> to vector<8x8xf32>
    %63 = arith.subf %56, %62 : vector<8x8xf32>
    %64 = math.exp %63 : vector<8x8xf32>
    %cst_34 = arith.constant dense<0.000000e+00> : vector<8xf32>
    %65 = vector.multi_reduction <add>, %64, %cst_34 [1] : vector<8x8xf32> to vector<8xf32>
    %66 = vector.shape_cast %65 : vector<8xf32> to vector<8x1xf32>
    %67 = tpu.reciprocal %66 {approx = true} : vector<8x1xf32> -> vector<8x1xf32>
    %68 = vector.broadcast %67 : vector<8x1xf32> to vector<8x8xf32>
    %69 = arith.mulf %64, %68 : vector<8x8xf32>
    %cst_35 = arith.constant dense<0.000000e+00> : vector<8x16xf32>
    %70 = tpu.matmul %69, %51, %cst_35 {dimension_numbers = #tpu.dot_dimension_numbers<[1], [0], [0], [1], [0, 0, 1, 1], [], []>} : vector<8x8xf32>, vector<8x16xf32>, vector<8x16xf32> -> vector<8x16xf32>
    %71 = vector.extract_strided_slice %46 {offsets = [0, 16], sizes = [8, 16], strides = [1, 1]} : vector<8x32xf32> to vector<8x16xf32>
    %72 = vector.extract_strided_slice %47 {offsets = [0, 16], sizes = [8, 16], strides = [1, 1]} : vector<8x32xf32> to vector<8x16xf32>
    %73 = vector.extract_strided_slice %48 {offsets = [0, 16], sizes = [8, 16], strides = [1, 1]} : vector<8x32xf32> to vector<8x16xf32>
    %cst_36 = arith.constant dense<0.000000e+00> : vector<8x8xf32>
    %74 = tpu.matmul %71, %72, %cst_36 {dimension_numbers = #tpu.dot_dimension_numbers<[1], [1], [0], [0], [0, 0, 1, 0], [], []>} : vector<8x16xf32>, vector<8x16xf32>, vector<8x8xf32> -> vector<8x8xf32>
    %cst_37 = arith.constant 2.500000e-01 : f32
    %75 = vector.broadcast %cst_37 : f32 to vector<8x8xf32>
    %76 = arith.mulf %74, %75 : vector<8x8xf32>
    %77 = vector.broadcast %31 : vector<1x8xf32> to vector<8x8xf32>
    %78 = arith.addf %76, %77 : vector<8x8xf32>
    %c1_38 = arith.constant 1 : index
    %c0_39 = arith.constant 0 : index
    %c0_40 = arith.constant 0 : index
    %79 = vector.load %arg8[%c1_38, %c0_39, %c0_40] : memref<8x8x8xf32, #tpu.memory_space<vmem>>, vector<1x8x8xf32>
    %80 = vector.shape_cast %79 : vector<1x8x8xf32> to vector<8x8xf32>
    %81 = vector.shape_cast %78 : vector<8x8xf32> to vector<1x8x8xf32>
    tpu.vector_store %arg8[%c1_38, %c0_39, %c0_40], %81 {strides = array<i32>} : memref<8x8x8xf32, #tpu.memory_space<vmem>>, vector<1x8x8xf32>,
    %cst_41 = arith.constant dense<0xFF800000> : vector<8xf32>
    %82 = vector.multi_reduction <maximumf>, %78, %cst_41 [1] : vector<8x8xf32> to vector<8xf32>
    %83 = vector.shape_cast %82 : vector<8xf32> to vector<8x1xf32>
    %84 = vector.broadcast %83 : vector<8x1xf32> to vector<8x8xf32>
    %85 = arith.subf %78, %84 : vector<8x8xf32>
    %86 = math.exp %85 : vector<8x8xf32>
    %cst_42 = arith.constant dense<0.000000e+00> : vector<8xf32>
    %87 = vector.multi_reduction <add>, %86, %cst_42 [1] : vector<8x8xf32> to vector<8xf32>
    %88 = vector.shape_cast %87 : vector<8xf32> to vector<8x1xf32>
    %89 = tpu.reciprocal %88 {approx = true} : vector<8x1xf32> -> vector<8x1xf32>
    %90 = vector.broadcast %89 : vector<8x1xf32> to vector<8x8xf32>
    %91 = arith.mulf %86, %90 : vector<8x8xf32>
    %cst_43 = arith.constant dense<0.000000e+00> : vector<8x16xf32>
    %92 = tpu.matmul %91, %73, %cst_43 {dimension_numbers = #tpu.dot_dimension_numbers<[1], [0], [0], [1], [0, 0, 1, 1], [], []>} : vector<8x8xf32>, vector<8x16xf32>, vector<8x16xf32> -> vector<8x16xf32>
    %93 = tpu.concatenate %70, %92 in 1 : vector<8x16xf32>, vector<8x16xf32> -> vector<8x32xf32>
    %94 = vector.extract_strided_slice %45 {offsets = [8, 0], sizes = [8, 32], strides = [1, 1]} : vector<16x96xf32> to vector<8x32xf32>
    %95 = vector.extract_strided_slice %45 {offsets = [8, 32], sizes = [8, 32], strides = [1, 1]} : vector<16x96xf32> to vector<8x32xf32>
    %96 = vector.extract_strided_slice %45 {offsets = [8, 64], sizes = [8, 32], strides = [1, 1]} : vector<16x96xf32> to vector<8x32xf32>
    %97 = vector.extract_strided_slice %94 {offsets = [0, 0], sizes = [8, 16], strides = [1, 1]} : vector<8x32xf32> to vector<8x16xf32>
    %98 = vector.extract_strided_slice %95 {offsets = [0, 0], sizes = [8, 16], strides = [1, 1]} : vector<8x32xf32> to vector<8x16xf32>
    %99 = vector.extract_strided_slice %96 {offsets = [0, 0], sizes = [8, 16], strides = [1, 1]} : vector<8x32xf32> to vector<8x16xf32>
    %cst_44 = arith.constant dense<0.000000e+00> : vector<8x8xf32>
    %100 = tpu.matmul %97, %98, %cst_44 {dimension_numbers = #tpu.dot_dimension_numbers<[1], [1], [0], [0], [0, 0, 1, 0], [], []>} : vector<8x16xf32>, vector<8x16xf32>, vector<8x8xf32> -> vector<8x8xf32>
    %cst_45 = arith.constant 2.500000e-01 : f32
    %101 = vector.broadcast %cst_45 : f32 to vector<8x8xf32>
    %102 = arith.mulf %100, %101 : vector<8x8xf32>
    %103 = vector.broadcast %32 : vector<1x8xf32> to vector<8x8xf32>
    %104 = arith.addf %102, %103 : vector<8x8xf32>
    %c2_46 = arith.constant 2 : index
    %c0_47 = arith.constant 0 : index
    %c0_48 = arith.constant 0 : index
    %105 = vector.load %arg8[%c2_46, %c0_47, %c0_48] : memref<8x8x8xf32, #tpu.memory_space<vmem>>, vector<1x8x8xf32>
    %106 = vector.shape_cast %105 : vector<1x8x8xf32> to vector<8x8xf32>
    %107 = vector.shape_cast %104 : vector<8x8xf32> to vector<1x8x8xf32>
    tpu.vector_store %arg8[%c2_46, %c0_47, %c0_48], %107 {strides = array<i32>} : memref<8x8x8xf32, #tpu.memory_space<vmem>>, vector<1x8x8xf32>,
    %cst_49 = arith.constant dense<0xFF800000> : vector<8xf32>
    %108 = vector.multi_reduction <maximumf>, %104, %cst_49 [1] : vector<8x8xf32> to vector<8xf32>
    %109 = vector.shape_cast %108 : vector<8xf32> to vector<8x1xf32>
    %110 = vector.broadcast %109 : vector<8x1xf32> to vector<8x8xf32>
    %111 = arith.subf %104, %110 : vector<8x8xf32>
    %112 = math.exp %111 : vector<8x8xf32>
    %cst_50 = arith.constant dense<0.000000e+00> : vector<8xf32>
    %113 = vector.multi_reduction <add>, %112, %cst_50 [1] : vector<8x8xf32> to vector<8xf32>
    %114 = vector.shape_cast %113 : vector<8xf32> to vector<8x1xf32>
    %115 = tpu.reciprocal %114 {approx = true} : vector<8x1xf32> -> vector<8x1xf32>
    %116 = vector.broadcast %115 : vector<8x1xf32> to vector<8x8xf32>
    %117 = arith.mulf %112, %116 : vector<8x8xf32>
    %cst_51 = arith.constant dense<0.000000e+00> : vector<8x16xf32>
    %118 = tpu.matmul %117, %99, %cst_51 {dimension_numbers = #tpu.dot_dimension_numbers<[1], [0], [0], [1], [0, 0, 1, 1], [], []>} : vector<8x8xf32>, vector<8x16xf32>, vector<8x16xf32> -> vector<8x16xf32>
    %119 = vector.extract_strided_slice %94 {offsets = [0, 16], sizes = [8, 16], strides = [1, 1]} : vector<8x32xf32> to vector<8x16xf32>
    %120 = vector.extract_strided_slice %95 {offsets = [0, 16], sizes = [8, 16], strides = [1, 1]} : vector<8x32xf32> to vector<8x16xf32>
    %121 = vector.extract_strided_slice %96 {offsets = [0, 16], sizes = [8, 16], strides = [1, 1]} : vector<8x32xf32> to vector<8x16xf32>
    %cst_52 = arith.constant dense<0.000000e+00> : vector<8x8xf32>
    %122 = tpu.matmul %119, %120, %cst_52 {dimension_numbers = #tpu.dot_dimension_numbers<[1], [1], [0], [0], [0, 0, 1, 0], [], []>} : vector<8x16xf32>, vector<8x16xf32>, vector<8x8xf32> -> vector<8x8xf32>
    %cst_53 = arith.constant 2.500000e-01 : f32
    %123 = vector.broadcast %cst_53 : f32 to vector<8x8xf32>
    %124 = arith.mulf %122, %123 : vector<8x8xf32>
    %125 = vector.broadcast %32 : vector<1x8xf32> to vector<8x8xf32>
    %126 = arith.addf %124, %125 : vector<8x8xf32>
    %c3_54 = arith.constant 3 : index
    %c0_55 = arith.constant 0 : index
    %c0_56 = arith.constant 0 : index
    %127 = vector.load %arg8[%c3_54, %c0_55, %c0_56] : memref<8x8x8xf32, #tpu.memory_space<vmem>>, vector<1x8x8xf32>
    %128 = vector.shape_cast %127 : vector<1x8x8xf32> to vector<8x8xf32>
    %129 = vector.shape_cast %126 : vector<8x8xf32> to vector<1x8x8xf32>
    tpu.vector_store %arg8[%c3_54, %c0_55, %c0_56], %129 {strides = array<i32>} : memref<8x8x8xf32, #tpu.memory_space<vmem>>, vector<1x8x8xf32>,
    %cst_57 = arith.constant dense<0xFF800000> : vector<8xf32>
    %130 = vector.multi_reduction <maximumf>, %126, %cst_57 [1] : vector<8x8xf32> to vector<8xf32>
    %131 = vector.shape_cast %130 : vector<8xf32> to vector<8x1xf32>
    %132 = vector.broadcast %131 : vector<8x1xf32> to vector<8x8xf32>
    %133 = arith.subf %126, %132 : vector<8x8xf32>
    %134 = math.exp %133 : vector<8x8xf32>
    %cst_58 = arith.constant dense<0.000000e+00> : vector<8xf32>
    %135 = vector.multi_reduction <add>, %134, %cst_58 [1] : vector<8x8xf32> to vector<8xf32>
    %136 = vector.shape_cast %135 : vector<8xf32> to vector<8x1xf32>
    %137 = tpu.reciprocal %136 {approx = true} : vector<8x1xf32> -> vector<8x1xf32>
    %138 = vector.broadcast %137 : vector<8x1xf32> to vector<8x8xf32>
    %139 = arith.mulf %134, %138 : vector<8x8xf32>
    %cst_59 = arith.constant dense<0.000000e+00> : vector<8x16xf32>
    %140 = tpu.matmul %139, %121, %cst_59 {dimension_numbers = #tpu.dot_dimension_numbers<[1], [0], [0], [1], [0, 0, 1, 1], [], []>} : vector<8x8xf32>, vector<8x16xf32>, vector<8x16xf32> -> vector<8x16xf32>
    %141 = tpu.concatenate %118, %140 in 1 : vector<8x16xf32>, vector<8x16xf32> -> vector<8x32xf32>
    %142 = tpu.concatenate %93, %141 in 0 : vector<8x32xf32>, vector<8x32xf32> -> vector<16x32xf32>
    %c0_60 = arith.constant 0 : index
    %c0_61 = arith.constant 0 : index
    %c0_62 = arith.constant 0 : index
    %143 = vector.load %arg4[%c0_60, %c0_61, %c0_62] : memref<2x32x32xf32, #tpu.memory_space<vmem>>, vector<1x32x32xf32>
    %144 = vector.shape_cast %143 : vector<1x32x32xf32> to vector<32x32xf32>
    %cst_63 = arith.constant dense<0.000000e+00> : vector<16x32xf32>
    %145 = tpu.matmul %142, %144, %cst_63 {dimension_numbers = #tpu.dot_dimension_numbers<[1], [0], [0], [1], [0, 0, 1, 1], [], []>} : vector<16x32xf32>, vector<32x32xf32>, vector<16x32xf32> -> vector<16x32xf32>
    %146 = vector.broadcast %34 : vector<1x32xf32> to vector<16x32xf32>
    %147 = arith.addf %145, %146 : vector<16x32xf32>
    %148 = arith.addf %147, %26 : vector<16x32xf32>
    %cst_64 = arith.constant dense<0.000000e+00> : vector<16xf32>
    %149 = vector.multi_reduction <add>, %148, %cst_64 [1] : vector<16x32xf32> to vector<16xf32>
    %150 = vector.shape_cast %149 : vector<16xf32> to vector<16x1xf32>
    %cst_65 = arith.constant 3.200000e+01 : f32
    %151 = vector.broadcast %cst_65 : f32 to vector<16x1xf32>
    %152 = arith.divf %150, %151 : vector<16x1xf32>
    %153 = vector.broadcast %152 : vector<16x1xf32> to vector<16x32xf32>
    %154 = arith.subf %148, %153 : vector<16x32xf32>
    %155 = arith.mulf %154, %154 : vector<16x32xf32>
    %cst_66 = arith.constant dense<0.000000e+00> : vector<16xf32>
    %156 = vector.multi_reduction <add>, %155, %cst_66 [1] : vector<16x32xf32> to vector<16xf32>
    %157 = vector.shape_cast %156 : vector<16xf32> to vector<16x1xf32>
    %cst_67 = arith.constant 3.200000e+01 : f32
    %158 = vector.broadcast %cst_67 : f32 to vector<16x1xf32>
    %159 = arith.divf %157, %158 : vector<16x1xf32>
    %160 = vector.broadcast %152 : vector<16x1xf32> to vector<16x32xf32>
    %161 = arith.subf %148, %160 : vector<16x32xf32>
    %cst_68 = arith.constant 9.99999996E-13 : f32
    %162 = vector.broadcast %cst_68 : f32 to vector<16x1xf32>
    %163 = arith.addf %159, %162 : vector<16x1xf32>
    %164 = math.rsqrt %163 : vector<16x1xf32>
    %165 = vector.broadcast %164 : vector<16x1xf32> to vector<16x32xf32>
    %166 = arith.mulf %161, %165 : vector<16x32xf32>
    %167 = vector.broadcast %35 : vector<1x32xf32> to vector<16x32xf32>
    %168 = arith.mulf %166, %167 : vector<16x32xf32>
    %169 = vector.broadcast %36 : vector<1x32xf32> to vector<16x32xf32>
    %170 = arith.addf %168, %169 : vector<16x32xf32>
    %c0_69 = arith.constant 0 : index
    %c0_70 = arith.constant 0 : index
    %c0_71 = arith.constant 0 : index
    %171 = vector.load %arg5[%c0_69, %c0_70, %c0_71] : memref<2x32x64xf32, #tpu.memory_space<vmem>>, vector<1x32x64xf32>
    %172 = vector.shape_cast %171 : vector<1x32x64xf32> to vector<32x64xf32>
    %cst_72 = arith.constant dense<0.000000e+00> : vector<16x64xf32>
    %173 = tpu.matmul %170, %172, %cst_72 {dimension_numbers = #tpu.dot_dimension_numbers<[1], [0], [0], [1], [0, 0, 1, 1], [], []>} : vector<16x32xf32>, vector<32x64xf32>, vector<16x64xf32> -> vector<16x64xf32>
    %174 = vector.broadcast %37 : vector<1x64xf32> to vector<16x64xf32>
    %175 = arith.addf %173, %174 : vector<16x64xf32>
    %cst_73 = arith.constant 5.000000e-01 : f32
    %176 = vector.broadcast %cst_73 : f32 to vector<16x64xf32>
    %177 = arith.mulf %176, %175 : vector<16x64xf32>
    %cst_74 = arith.constant 0.707106769 : f32
    %178 = vector.broadcast %cst_74 : f32 to vector<16x64xf32>
    %179 = arith.mulf %175, %178 : vector<16x64xf32>
    %180 = math.erf %179 : vector<16x64xf32>
    %cst_75 = arith.constant 1.000000e+00 : f32
    %181 = vector.broadcast %cst_75 : f32 to vector<16x64xf32>
    %182 = arith.addf %181, %180 : vector<16x64xf32>
    %183 = arith.mulf %177, %182 : vector<16x64xf32>
    %c0_76 = arith.constant 0 : index
    %c0_77 = arith.constant 0 : index
    %c0_78 = arith.constant 0 : index
    %184 = vector.load %arg6[%c0_76, %c0_77, %c0_78] : memref<2x64x32xf32, #tpu.memory_space<vmem>>, vector<1x64x32xf32>
    %185 = vector.shape_cast %184 : vector<1x64x32xf32> to vector<64x32xf32>
    %cst_79 = arith.constant dense<0.000000e+00> : vector<16x32xf32>
    %186 = tpu.matmul %183, %185, %cst_79 {dimension_numbers = #tpu.dot_dimension_numbers<[1], [0], [0], [1], [0, 0, 1, 1], [], []>} : vector<16x64xf32>, vector<64x32xf32>, vector<16x32xf32> -> vector<16x32xf32>
    %187 = vector.broadcast %38 : vector<1x32xf32> to vector<16x32xf32>
    %188 = arith.addf %186, %187 : vector<16x32xf32>
    %189 = arith.addf %188, %170 : vector<16x32xf32>
    %cst_80 = arith.constant dense<0.000000e+00> : vector<16xf32>
    %190 = vector.multi_reduction <add>, %189, %cst_80 [1] : vector<16x32xf32> to vector<16xf32>
    %191 = vector.shape_cast %190 : vector<16xf32> to vector<16x1xf32>
    %cst_81 = arith.constant 3.200000e+01 : f32
    %192 = vector.broadcast %cst_81 : f32 to vector<16x1xf32>
    %193 = arith.divf %191, %192 : vector<16x1xf32>
    %194 = vector.broadcast %193 : vector<16x1xf32> to vector<16x32xf32>
    %195 = arith.subf %189, %194 : vector<16x32xf32>
    %196 = arith.mulf %195, %195 : vector<16x32xf32>
    %cst_82 = arith.constant dense<0.000000e+00> : vector<16xf32>
    %197 = vector.multi_reduction <add>, %196, %cst_82 [1] : vector<16x32xf32> to vector<16xf32>
    %198 = vector.shape_cast %197 : vector<16xf32> to vector<16x1xf32>
    %cst_83 = arith.constant 3.200000e+01 : f32
    %199 = vector.broadcast %cst_83 : f32 to vector<16x1xf32>
    %200 = arith.divf %198, %199 : vector<16x1xf32>
    %201 = vector.broadcast %193 : vector<16x1xf32> to vector<16x32xf32>
    %202 = arith.subf %189, %201 : vector<16x32xf32>
    %cst_84 = arith.constant 9.99999996E-13 : f32
    %203 = vector.broadcast %cst_84 : f32 to vector<16x1xf32>
    %204 = arith.addf %200, %203 : vector<16x1xf32>
    %205 = math.rsqrt %204 : vector<16x1xf32>
    %206 = vector.broadcast %205 : vector<16x1xf32> to vector<16x32xf32>
    %207 = arith.mulf %202, %206 : vector<16x32xf32>
    %208 = vector.broadcast %39 : vector<1x32xf32> to vector<16x32xf32>
    %209 = arith.mulf %207, %208 : vector<16x32xf32>
    %210 = vector.broadcast %40 : vector<1x32xf32> to vector<16x32xf32>
    %211 = arith.addf %209, %210 : vector<16x32xf32>
    %cst_85 = arith.constant dense<0.000000e+00> : vector<16x48xf32>
    %212 = tpu.matmul %211, %0, %cst_85 {dimension_numbers = #tpu.dot_dimension_numbers<[1], [0], [0], [1], [0, 0, 1, 1], [], []>} : vector<16x32xf32>, vector<32x48xf32>, vector<16x48xf32> -> vector<16x48xf32>
    %213 = vector.broadcast %1 : vector<1x48xf32> to vector<16x48xf32>
    %214 = arith.addf %212, %213 : vector<16x48xf32>
    %c16 = arith.constant 16 : index
    %c0_86 = arith.constant 0 : index
    %215 = vector.load %arg9[%c16, %c0_86] : memref<48x48xf32, #tpu.memory_space<vmem>>, vector<16x48xf32>
    tpu.vector_store %arg9[%c16, %c0_86], %214 {strides = array<i32>} : memref<48x48xf32, #tpu.memory_space<vmem>>, vector<16x48xf32>,
    %c13 = arith.constant 13 : index
    %c0_87 = arith.constant 0 : index
    %216 = vector.load %arg1[%c13, %c0_87] : memref<21x96xf32, #tpu.memory_space<vmem>>, vector<1x96xf32>
    %c14 = arith.constant 14 : index
    %c0_88 = arith.constant 0 : index
    %217 = vector.load %arg1[%c14, %c0_88] : memref<21x96xf32, #tpu.memory_space<vmem>>, vector<1x32xf32>
    %c15 = arith.constant 15 : index
    %c0_89 = arith.constant 0 : index
    %218 = vector.load %arg1[%c15, %c0_89] : memref<21x96xf32, #tpu.memory_space<vmem>>, vector<1x32xf32>
    %c16_90 = arith.constant 16 : index
    %c0_91 = arith.constant 0 : index
    %219 = vector.load %arg1[%c16_90, %c0_91] : memref<21x96xf32, #tpu.memory_space<vmem>>, vector<1x32xf32>
    %c17 = arith.constant 17 : index
    %c0_92 = arith.constant 0 : index
    %220 = vector.load %arg1[%c17, %c0_92] : memref<21x96xf32, #tpu.memory_space<vmem>>, vector<1x64xf32>
    %c18 = arith.constant 18 : index
    %c0_93 = arith.constant 0 : index
    %221 = vector.load %arg1[%c18, %c0_93] : memref<21x96xf32, #tpu.memory_space<vmem>>, vector<1x32xf32>
    %c19 = arith.constant 19 : index
    %c0_94 = arith.constant 0 : index
    %222 = vector.load %arg1[%c19, %c0_94] : memref<21x96xf32, #tpu.memory_space<vmem>>, vector<1x32xf32>
    %c20 = arith.constant 20 : index
    %c0_95 = arith.constant 0 : index
    %223 = vector.load %arg1[%c20, %c0_95] : memref<21x96xf32, #tpu.memory_space<vmem>>, vector<1x32xf32>
    %c1_96 = arith.constant 1 : index
    %c0_97 = arith.constant 0 : index
    %c0_98 = arith.constant 0 : index
    %224 = vector.load %arg3[%c1_96, %c0_97, %c0_98] : memref<2x32x96xf32, #tpu.memory_space<vmem>>, vector<1x32x96xf32>
    %225 = vector.shape_cast %224 : vector<1x32x96xf32> to vector<32x96xf32>
    %cst_99 = arith.constant dense<0.000000e+00> : vector<16x96xf32>
    %226 = tpu.matmul %211, %225, %cst_99 {dimension_numbers = #tpu.dot_dimension_numbers<[1], [0], [0], [1], [0, 0, 1, 1], [], []>} : vector<16x32xf32>, vector<32x96xf32>, vector<16x96xf32> -> vector<16x96xf32>
    %227 = vector.broadcast %216 : vector<1x96xf32> to vector<16x96xf32>
    %228 = arith.addf %226, %227 : vector<16x96xf32>
    %229 = vector.extract_strided_slice %228 {offsets = [0, 0], sizes = [8, 32], strides = [1, 1]} : vector<16x96xf32> to vector<8x32xf32>
    %230 = vector.extract_strided_slice %228 {offsets = [0, 32], sizes = [8, 32], strides = [1, 1]} : vector<16x96xf32> to vector<8x32xf32>
    %231 = vector.extract_strided_slice %228 {offsets = [0, 64], sizes = [8, 32], strides = [1, 1]} : vector<16x96xf32> to vector<8x32xf32>
    %232 = vector.extract_strided_slice %229 {offsets = [0, 0], sizes = [8, 16], strides = [1, 1]} : vector<8x32xf32> to vector<8x16xf32>
    %233 = vector.extract_strided_slice %230 {offsets = [0, 0], sizes = [8, 16], strides = [1, 1]} : vector<8x32xf32> to vector<8x16xf32>
    %234 = vector.extract_strided_slice %231 {offsets = [0, 0], sizes = [8, 16], strides = [1, 1]} : vector<8x32xf32> to vector<8x16xf32>
    %cst_100 = arith.constant dense<0.000000e+00> : vector<8x8xf32>
    %235 = tpu.matmul %232, %233, %cst_100 {dimension_numbers = #tpu.dot_dimension_numbers<[1], [1], [0], [0], [0, 0, 1, 0], [], []>} : vector<8x16xf32>, vector<8x16xf32>, vector<8x8xf32> -> vector<8x8xf32>
    %cst_101 = arith.constant 2.500000e-01 : f32
    %236 = vector.broadcast %cst_101 : f32 to vector<8x8xf32>
    %237 = arith.mulf %235, %236 : vector<8x8xf32>
    %238 = vector.broadcast %31 : vector<1x8xf32> to vector<8x8xf32>
    %239 = arith.addf %237, %238 : vector<8x8xf32>
    %c4_102 = arith.constant 4 : index
    %c0_103 = arith.constant 0 : index
    %c0_104 = arith.constant 0 : index
    %240 = vector.load %arg8[%c4_102, %c0_103, %c0_104] : memref<8x8x8xf32, #tpu.memory_space<vmem>>, vector<1x8x8xf32>
    %241 = vector.shape_cast %240 : vector<1x8x8xf32> to vector<8x8xf32>
    %242 = vector.shape_cast %239 : vector<8x8xf32> to vector<1x8x8xf32>
    tpu.vector_store %arg8[%c4_102, %c0_103, %c0_104], %242 {strides = array<i32>} : memref<8x8x8xf32, #tpu.memory_space<vmem>>, vector<1x8x8xf32>,
    %cst_105 = arith.constant dense<0xFF800000> : vector<8xf32>
    %243 = vector.multi_reduction <maximumf>, %239, %cst_105 [1] : vector<8x8xf32> to vector<8xf32>
    %244 = vector.shape_cast %243 : vector<8xf32> to vector<8x1xf32>
    %245 = vector.broadcast %244 : vector<8x1xf32> to vector<8x8xf32>
    %246 = arith.subf %239, %245 : vector<8x8xf32>
    %247 = math.exp %246 : vector<8x8xf32>
    %cst_106 = arith.constant dense<0.000000e+00> : vector<8xf32>
    %248 = vector.multi_reduction <add>, %247, %cst_106 [1] : vector<8x8xf32> to vector<8xf32>
    %249 = vector.shape_cast %248 : vector<8xf32> to vector<8x1xf32>
    %250 = tpu.reciprocal %249 {approx = true} : vector<8x1xf32> -> vector<8x1xf32>
    %251 = vector.broadcast %250 : vector<8x1xf32> to vector<8x8xf32>
    %252 = arith.mulf %247, %251 : vector<8x8xf32>
    %cst_107 = arith.constant dense<0.000000e+00> : vector<8x16xf32>
    %253 = tpu.matmul %252, %234, %cst_107 {dimension_numbers = #tpu.dot_dimension_numbers<[1], [0], [0], [1], [0, 0, 1, 1], [], []>} : vector<8x8xf32>, vector<8x16xf32>, vector<8x16xf32> -> vector<8x16xf32>
    %254 = vector.extract_strided_slice %229 {offsets = [0, 16], sizes = [8, 16], strides = [1, 1]} : vector<8x32xf32> to vector<8x16xf32>
    %255 = vector.extract_strided_slice %230 {offsets = [0, 16], sizes = [8, 16], strides = [1, 1]} : vector<8x32xf32> to vector<8x16xf32>
    %256 = vector.extract_strided_slice %231 {offsets = [0, 16], sizes = [8, 16], strides = [1, 1]} : vector<8x32xf32> to vector<8x16xf32>
    %cst_108 = arith.constant dense<0.000000e+00> : vector<8x8xf32>
    %257 = tpu.matmul %254, %255, %cst_108 {dimension_numbers = #tpu.dot_dimension_numbers<[1], [1], [0], [0], [0, 0, 1, 0], [], []>} : vector<8x16xf32>, vector<8x16xf32>, vector<8x8xf32> -> vector<8x8xf32>
    %cst_109 = arith.constant 2.500000e-01 : f32
    %258 = vector.broadcast %cst_109 : f32 to vector<8x8xf32>
    %259 = arith.mulf %257, %258 : vector<8x8xf32>
    %260 = vector.broadcast %31 : vector<1x8xf32> to vector<8x8xf32>
    %261 = arith.addf %259, %260 : vector<8x8xf32>
    %c5_110 = arith.constant 5 : index
    %c0_111 = arith.constant 0 : index
    %c0_112 = arith.constant 0 : index
    %262 = vector.load %arg8[%c5_110, %c0_111, %c0_112] : memref<8x8x8xf32, #tpu.memory_space<vmem>>, vector<1x8x8xf32>
    %263 = vector.shape_cast %262 : vector<1x8x8xf32> to vector<8x8xf32>
    %264 = vector.shape_cast %261 : vector<8x8xf32> to vector<1x8x8xf32>
    tpu.vector_store %arg8[%c5_110, %c0_111, %c0_112], %264 {strides = array<i32>} : memref<8x8x8xf32, #tpu.memory_space<vmem>>, vector<1x8x8xf32>,
    %cst_113 = arith.constant dense<0xFF800000> : vector<8xf32>
    %265 = vector.multi_reduction <maximumf>, %261, %cst_113 [1] : vector<8x8xf32> to vector<8xf32>
    %266 = vector.shape_cast %265 : vector<8xf32> to vector<8x1xf32>
    %267 = vector.broadcast %266 : vector<8x1xf32> to vector<8x8xf32>
    %268 = arith.subf %261, %267 : vector<8x8xf32>
    %269 = math.exp %268 : vector<8x8xf32>
    %cst_114 = arith.constant dense<0.000000e+00> : vector<8xf32>
    %270 = vector.multi_reduction <add>, %269, %cst_114 [1] : vector<8x8xf32> to vector<8xf32>
    %271 = vector.shape_cast %270 : vector<8xf32> to vector<8x1xf32>
    %272 = tpu.reciprocal %271 {approx = true} : vector<8x1xf32> -> vector<8x1xf32>
    %273 = vector.broadcast %272 : vector<8x1xf32> to vector<8x8xf32>
    %274 = arith.mulf %269, %273 : vector<8x8xf32>
    %cst_115 = arith.constant dense<0.000000e+00> : vector<8x16xf32>
    %275 = tpu.matmul %274, %256, %cst_115 {dimension_numbers = #tpu.dot_dimension_numbers<[1], [0], [0], [1], [0, 0, 1, 1], [], []>} : vector<8x8xf32>, vector<8x16xf32>, vector<8x16xf32> -> vector<8x16xf32>
    %276 = tpu.concatenate %253, %275 in 1 : vector<8x16xf32>, vector<8x16xf32> -> vector<8x32xf32>
    %277 = vector.extract_strided_slice %228 {offsets = [8, 0], sizes = [8, 32], strides = [1, 1]} : vector<16x96xf32> to vector<8x32xf32>
    %278 = vector.extract_strided_slice %228 {offsets = [8, 32], sizes = [8, 32], strides = [1, 1]} : vector<16x96xf32> to vector<8x32xf32>
    %279 = vector.extract_strided_slice %228 {offsets = [8, 64], sizes = [8, 32], strides = [1, 1]} : vector<16x96xf32> to vector<8x32xf32>
    %280 = vector.extract_strided_slice %277 {offsets = [0, 0], sizes = [8, 16], strides = [1, 1]} : vector<8x32xf32> to vector<8x16xf32>
    %281 = vector.extract_strided_slice %278 {offsets = [0, 0], sizes = [8, 16], strides = [1, 1]} : vector<8x32xf32> to vector<8x16xf32>
    %282 = vector.extract_strided_slice %279 {offsets = [0, 0], sizes = [8, 16], strides = [1, 1]} : vector<8x32xf32> to vector<8x16xf32>
    %cst_116 = arith.constant dense<0.000000e+00> : vector<8x8xf32>
    %283 = tpu.matmul %280, %281, %cst_116 {dimension_numbers = #tpu.dot_dimension_numbers<[1], [1], [0], [0], [0, 0, 1, 0], [], []>} : vector<8x16xf32>, vector<8x16xf32>, vector<8x8xf32> -> vector<8x8xf32>
    %cst_117 = arith.constant 2.500000e-01 : f32
    %284 = vector.broadcast %cst_117 : f32 to vector<8x8xf32>
    %285 = arith.mulf %283, %284 : vector<8x8xf32>
    %286 = vector.broadcast %32 : vector<1x8xf32> to vector<8x8xf32>
    %287 = arith.addf %285, %286 : vector<8x8xf32>
    %c6_118 = arith.constant 6 : index
    %c0_119 = arith.constant 0 : index
    %c0_120 = arith.constant 0 : index
    %288 = vector.load %arg8[%c6_118, %c0_119, %c0_120] : memref<8x8x8xf32, #tpu.memory_space<vmem>>, vector<1x8x8xf32>
    %289 = vector.shape_cast %288 : vector<1x8x8xf32> to vector<8x8xf32>
    %290 = vector.shape_cast %287 : vector<8x8xf32> to vector<1x8x8xf32>
    tpu.vector_store %arg8[%c6_118, %c0_119, %c0_120], %290 {strides = array<i32>} : memref<8x8x8xf32, #tpu.memory_space<vmem>>, vector<1x8x8xf32>,
    %cst_121 = arith.constant dense<0xFF800000> : vector<8xf32>
    %291 = vector.multi_reduction <maximumf>, %287, %cst_121 [1] : vector<8x8xf32> to vector<8xf32>
    %292 = vector.shape_cast %291 : vector<8xf32> to vector<8x1xf32>
    %293 = vector.broadcast %292 : vector<8x1xf32> to vector<8x8xf32>
    %294 = arith.subf %287, %293 : vector<8x8xf32>
    %295 = math.exp %294 : vector<8x8xf32>
    %cst_122 = arith.constant dense<0.000000e+00> : vector<8xf32>
    %296 = vector.multi_reduction <add>, %295, %cst_122 [1] : vector<8x8xf32> to vector<8xf32>
    %297 = vector.shape_cast %296 : vector<8xf32> to vector<8x1xf32>
    %298 = tpu.reciprocal %297 {approx = true} : vector<8x1xf32> -> vector<8x1xf32>
    %299 = vector.broadcast %298 : vector<8x1xf32> to vector<8x8xf32>
    %300 = arith.mulf %295, %299 : vector<8x8xf32>
    %cst_123 = arith.constant dense<0.000000e+00> : vector<8x16xf32>
    %301 = tpu.matmul %300, %282, %cst_123 {dimension_numbers = #tpu.dot_dimension_numbers<[1], [0], [0], [1], [0, 0, 1, 1], [], []>} : vector<8x8xf32>, vector<8x16xf32>, vector<8x16xf32> -> vector<8x16xf32>
    %302 = vector.extract_strided_slice %277 {offsets = [0, 16], sizes = [8, 16], strides = [1, 1]} : vector<8x32xf32> to vector<8x16xf32>
    %303 = vector.extract_strided_slice %278 {offsets = [0, 16], sizes = [8, 16], strides = [1, 1]} : vector<8x32xf32> to vector<8x16xf32>
    %304 = vector.extract_strided_slice %279 {offsets = [0, 16], sizes = [8, 16], strides = [1, 1]} : vector<8x32xf32> to vector<8x16xf32>
    %cst_124 = arith.constant dense<0.000000e+00> : vector<8x8xf32>
    %305 = tpu.matmul %302, %303, %cst_124 {dimension_numbers = #tpu.dot_dimension_numbers<[1], [1], [0], [0], [0, 0, 1, 0], [], []>} : vector<8x16xf32>, vector<8x16xf32>, vector<8x8xf32> -> vector<8x8xf32>
    %cst_125 = arith.constant 2.500000e-01 : f32
    %306 = vector.broadcast %cst_125 : f32 to vector<8x8xf32>
    %307 = arith.mulf %305, %306 : vector<8x8xf32>
    %308 = vector.broadcast %32 : vector<1x8xf32> to vector<8x8xf32>
    %309 = arith.addf %307, %308 : vector<8x8xf32>
    %c7_126 = arith.constant 7 : index
    %c0_127 = arith.constant 0 : index
    %c0_128 = arith.constant 0 : index
    %310 = vector.load %arg8[%c7_126, %c0_127, %c0_128] : memref<8x8x8xf32, #tpu.memory_space<vmem>>, vector<1x8x8xf32>
    %311 = vector.shape_cast %310 : vector<1x8x8xf32> to vector<8x8xf32>
    %312 = vector.shape_cast %309 : vector<8x8xf32> to vector<1x8x8xf32>
    tpu.vector_store %arg8[%c7_126, %c0_127, %c0_128], %312 {strides = array<i32>} : memref<8x8x8xf32, #tpu.memory_space<vmem>>, vector<1x8x8xf32>,
    %cst_129 = arith.constant dense<0xFF800000> : vector<8xf32>
    %313 = vector.multi_reduction <maximumf>, %309, %cst_129 [1] : vector<8x8xf32> to vector<8xf32>
    %314 = vector.shape_cast %313 : vector<8xf32> to vector<8x1xf32>
    %315 = vector.broadcast %314 : vector<8x1xf32> to vector<8x8xf32>
    %316 = arith.subf %309, %315 : vector<8x8xf32>
    %317 = math.exp %316 : vector<8x8xf32>
    %cst_130 = arith.constant dense<0.000000e+00> : vector<8xf32>
    %318 = vector.multi_reduction <add>, %317, %cst_130 [1] : vector<8x8xf32> to vector<8xf32>
    %319 = vector.shape_cast %318 : vector<8xf32> to vector<8x1xf32>
    %320 = tpu.reciprocal %319 {approx = true} : vector<8x1xf32> -> vector<8x1xf32>
    %321 = vector.broadcast %320 : vector<8x1xf32> to vector<8x8xf32>
    %322 = arith.mulf %317, %321 : vector<8x8xf32>
    %cst_131 = arith.constant dense<0.000000e+00> : vector<8x16xf32>
    %323 = tpu.matmul %322, %304, %cst_131 {dimension_numbers = #tpu.dot_dimension_numbers<[1], [0], [0], [1], [0, 0, 1, 1], [], []>} : vector<8x8xf32>, vector<8x16xf32>, vector<8x16xf32> -> vector<8x16xf32>
    %324 = tpu.concatenate %301, %323 in 1 : vector<8x16xf32>, vector<8x16xf32> -> vector<8x32xf32>
    %325 = tpu.concatenate %276, %324 in 0 : vector<8x32xf32>, vector<8x32xf32> -> vector<16x32xf32>
    %c1_132 = arith.constant 1 : index
    %c0_133 = arith.constant 0 : index
    %c0_134 = arith.constant 0 : index
    %326 = vector.load %arg4[%c1_132, %c0_133, %c0_134] : memref<2x32x32xf32, #tpu.memory_space<vmem>>, vector<1x32x32xf32>
    %327 = vector.shape_cast %326 : vector<1x32x32xf32> to vector<32x32xf32>
    %cst_135 = arith.constant dense<0.000000e+00> : vector<16x32xf32>
    %328 = tpu.matmul %325, %327, %cst_135 {dimension_numbers = #tpu.dot_dimension_numbers<[1], [0], [0], [1], [0, 0, 1, 1], [], []>} : vector<16x32xf32>, vector<32x32xf32>, vector<16x32xf32> -> vector<16x32xf32>
    %329 = vector.broadcast %217 : vector<1x32xf32> to vector<16x32xf32>
    %330 = arith.addf %328, %329 : vector<16x32xf32>
    %331 = arith.addf %330, %211 : vector<16x32xf32>
    %cst_136 = arith.constant dense<0.000000e+00> : vector<16xf32>
    %332 = vector.multi_reduction <add>, %331, %cst_136 [1] : vector<16x32xf32> to vector<16xf32>
    %333 = vector.shape_cast %332 : vector<16xf32> to vector<16x1xf32>
    %cst_137 = arith.constant 3.200000e+01 : f32
    %334 = vector.broadcast %cst_137 : f32 to vector<16x1xf32>
    %335 = arith.divf %333, %334 : vector<16x1xf32>
    %336 = vector.broadcast %335 : vector<16x1xf32> to vector<16x32xf32>
    %337 = arith.subf %331, %336 : vector<16x32xf32>
    %338 = arith.mulf %337, %337 : vector<16x32xf32>
    %cst_138 = arith.constant dense<0.000000e+00> : vector<16xf32>
    %339 = vector.multi_reduction <add>, %338, %cst_138 [1] : vector<16x32xf32> to vector<16xf32>
    %340 = vector.shape_cast %339 : vector<16xf32> to vector<16x1xf32>
    %cst_139 = arith.constant 3.200000e+01 : f32
    %341 = vector.broadcast %cst_139 : f32 to vector<16x1xf32>
    %342 = arith.divf %340, %341 : vector<16x1xf32>
    %343 = vector.broadcast %335 : vector<16x1xf32> to vector<16x32xf32>
    %344 = arith.subf %331, %343 : vector<16x32xf32>
    %cst_140 = arith.constant 9.99999996E-13 : f32
    %345 = vector.broadcast %cst_140 : f32 to vector<16x1xf32>
    %346 = arith.addf %342, %345 : vector<16x1xf32>
    %347 = math.rsqrt %346 : vector<16x1xf32>
    %348 = vector.broadcast %347 : vector<16x1xf32> to vector<16x32xf32>
    %349 = arith.mulf %344, %348 : vector<16x32xf32>
    %350 = vector.broadcast %218 : vector<1x32xf32> to vector<16x32xf32>
    %351 = arith.mulf %349, %350 : vector<16x32xf32>
    %352 = vector.broadcast %219 : vector<1x32xf32> to vector<16x32xf32>
    %353 = arith.addf %351, %352 : vector<16x32xf32>
    %c1_141 = arith.constant 1 : index
    %c0_142 = arith.constant 0 : index
    %c0_143 = arith.constant 0 : index
    %354 = vector.load %arg5[%c1_141, %c0_142, %c0_143] : memref<2x32x64xf32, #tpu.memory_space<vmem>>, vector<1x32x64xf32>
    %355 = vector.shape_cast %354 : vector<1x32x64xf32> to vector<32x64xf32>
    %cst_144 = arith.constant dense<0.000000e+00> : vector<16x64xf32>
    %356 = tpu.matmul %353, %355, %cst_144 {dimension_numbers = #tpu.dot_dimension_numbers<[1], [0], [0], [1], [0, 0, 1, 1], [], []>} : vector<16x32xf32>, vector<32x64xf32>, vector<16x64xf32> -> vector<16x64xf32>
    %357 = vector.broadcast %220 : vector<1x64xf32> to vector<16x64xf32>
    %358 = arith.addf %356, %357 : vector<16x64xf32>
    %cst_145 = arith.constant 5.000000e-01 : f32
    %359 = vector.broadcast %cst_145 : f32 to vector<16x64xf32>
    %360 = arith.mulf %359, %358 : vector<16x64xf32>
    %cst_146 = arith.constant 0.707106769 : f32
    %361 = vector.broadcast %cst_146 : f32 to vector<16x64xf32>
    %362 = arith.mulf %358, %361 : vector<16x64xf32>
    %363 = math.erf %362 : vector<16x64xf32>
    %cst_147 = arith.constant 1.000000e+00 : f32
    %364 = vector.broadcast %cst_147 : f32 to vector<16x64xf32>
    %365 = arith.addf %364, %363 : vector<16x64xf32>
    %366 = arith.mulf %360, %365 : vector<16x64xf32>
    %c1_148 = arith.constant 1 : index
    %c0_149 = arith.constant 0 : index
    %c0_150 = arith.constant 0 : index
    %367 = vector.load %arg6[%c1_148, %c0_149, %c0_150] : memref<2x64x32xf32, #tpu.memory_space<vmem>>, vector<1x64x32xf32>
    %368 = vector.shape_cast %367 : vector<1x64x32xf32> to vector<64x32xf32>
    %cst_151 = arith.constant dense<0.000000e+00> : vector<16x32xf32>
    %369 = tpu.matmul %366, %368, %cst_151 {dimension_numbers = #tpu.dot_dimension_numbers<[1], [0], [0], [1], [0, 0, 1, 1], [], []>} : vector<16x64xf32>, vector<64x32xf32>, vector<16x32xf32> -> vector<16x32xf32>
    %370 = vector.broadcast %221 : vector<1x32xf32> to vector<16x32xf32>
    %371 = arith.addf %369, %370 : vector<16x32xf32>
    %372 = arith.addf %371, %353 : vector<16x32xf32>
    %cst_152 = arith.constant dense<0.000000e+00> : vector<16xf32>
    %373 = vector.multi_reduction <add>, %372, %cst_152 [1] : vector<16x32xf32> to vector<16xf32>
    %374 = vector.shape_cast %373 : vector<16xf32> to vector<16x1xf32>
    %cst_153 = arith.constant 3.200000e+01 : f32
    %375 = vector.broadcast %cst_153 : f32 to vector<16x1xf32>
    %376 = arith.divf %374, %375 : vector<16x1xf32>
    %377 = vector.broadcast %376 : vector<16x1xf32> to vector<16x32xf32>
    %378 = arith.subf %372, %377 : vector<16x32xf32>
    %379 = arith.mulf %378, %378 : vector<16x32xf32>
    %cst_154 = arith.constant dense<0.000000e+00> : vector<16xf32>
    %380 = vector.multi_reduction <add>, %379, %cst_154 [1] : vector<16x32xf32> to vector<16xf32>
    %381 = vector.shape_cast %380 : vector<16xf32> to vector<16x1xf32>
    %cst_155 = arith.constant 3.200000e+01 : f32
    %382 = vector.broadcast %cst_155 : f32 to vector<16x1xf32>
    %383 = arith.divf %381, %382 : vector<16x1xf32>
    %384 = vector.broadcast %376 : vector<16x1xf32> to vector<16x32xf32>
    %385 = arith.subf %372, %384 : vector<16x32xf32>
    %cst_156 = arith.constant 9.99999996E-13 : f32
    %386 = vector.broadcast %cst_156 : f32 to vector<16x1xf32>
    %387 = arith.addf %383, %386 : vector<16x1xf32>
    %388 = math.rsqrt %387 : vector<16x1xf32>
    %389 = vector.broadcast %388 : vector<16x1xf32> to vector<16x32xf32>
    %390 = arith.mulf %385, %389 : vector<16x32xf32>
    %391 = vector.broadcast %222 : vector<1x32xf32> to vector<16x32xf32>
    %392 = arith.mulf %390, %391 : vector<16x32xf32>
    %393 = vector.broadcast %223 : vector<1x32xf32> to vector<16x32xf32>
    %394 = arith.addf %392, %393 : vector<16x32xf32>
    %cst_157 = arith.constant dense<0.000000e+00> : vector<16x48xf32>
    %395 = tpu.matmul %394, %0, %cst_157 {dimension_numbers = #tpu.dot_dimension_numbers<[1], [0], [0], [1], [0, 0, 1, 1], [], []>} : vector<16x32xf32>, vector<32x48xf32>, vector<16x48xf32> -> vector<16x48xf32>
    %396 = vector.broadcast %1 : vector<1x48xf32> to vector<16x48xf32>
    %397 = arith.addf %395, %396 : vector<16x48xf32>
    %c32 = arith.constant 32 : index
    %c0_158 = arith.constant 0 : index
    %398 = vector.load %arg9[%c32, %c0_158] : memref<48x48xf32, #tpu.memory_space<vmem>>, vector<16x48xf32>
    tpu.vector_store %arg9[%c32, %c0_158], %397 {strides = array<i32>} : memref<48x48xf32, #tpu.memory_space<vmem>>, vector<16x48xf32>,
    %c0_159 = arith.constant 0 : index
    %c0_160 = arith.constant 0 : index
    %399 = vector.load %arg7[%c0_159, %c0_160] : memref<16x32xf32, #tpu.memory_space<vmem>>, vector<16x32xf32>
    tpu.vector_store %arg7[%c0_159, %c0_160], %394 {strides = array<i32>} : memref<16x32xf32, #tpu.memory_space<vmem>>, vector<16x32xf32>,
    return
  }
}

</mosaic_0001>

<llo_original>
// kernel: run.1
$region0: #{run.1}
  #allocation0 [shape = 'u32[]', space=smem, size = 0x4, offset = 0x4, fixed_abs, tag = 'smem constant byte address 0x4 - core index']
  #allocation1 [shape = 'u32[72,128]{1,0:T(1,128)}', space=vmem, size = 0x9000, scoped, tag = 'internal scratch']
  %s0 = inlined_call_operand.vmem [shape: f32[16,32], index: 0, kind: input, shape index: {}]
  %s1 = inlined_call_operand.vmem [shape: f32[21,96], index: 1, kind: input, shape index: {}]
  %s2 = inlined_call_operand.vmem [shape: f32[32,48], index: 2, kind: input, shape index: {}]
  %s3 = inlined_call_operand.vmem [shape: f32[2,32,96], index: 3, kind: input, shape index: {}]
  %s4 = inlined_call_operand.vmem [shape: f32[2,32,32], index: 4, kind: input, shape index: {}]
  %s5 = inlined_call_operand.vmem [shape: f32[2,32,64], index: 5, kind: input, shape index: {}]
  %s6 = inlined_call_operand.vmem [shape: f32[2,64,32], index: 6, kind: input, shape index: {}]
  %s7 = inlined_call_operand.hbm [shape: f32[16,32], index: 7, kind: output, shape index: {0}]
  %s8 = inlined_call_operand.vmem [shape: f32[8,8,8], index: 8, kind: output, shape index: {1}]
  %s9 = inlined_call_operand.vmem [shape: f32[48,48], index: 9, kind: output, shape index: {2}]
  %10 = xla_tuple %s7, %s8, %s9
  %s11 = sld [smem:[#allocation0]]
  $region54: #{run.1} parent=0
    _
  %s13 = ssub.s32 1, %s11
  %s14 = scalar_select 0, %s13, %s11
  $region1: #{run.1} parent=0
    #allocation2 [shape = 'u8[8192]{0}', space=vmem, size = 0x2000, scoped, tag = 'output window, operand 0, single buffered']
    #allocation3 [shape = 's32[1]{0}', space=sflag, size = 0x4, scoped, tag = 'scoped memory for run.1']
    %15 = vsyncpa [#allocation3], 0
    // Predicated region
    $region2: #{run.1} parent=1 // pred_check
      _
    $region3: #{run.1} parent=1 // pred_check_branch
      %17 = sbr.rel (0) target = $region5
    $region4: #{run.1} parent=1 // pred_region
      _
    $region5: #{run.1} parent=1 // pred_fallthru
      _
    // Predicated region
    $region6: #{run.1} parent=1 // pred_check
      _
    $region7: #{run.1} parent=1 // pred_check_branch
      %19 = sbr.rel (0) target = $region9
    $region8: #{run.1} parent=1 // pred_region
      _
    $region9: #{run.1} parent=1 // pred_fallthru
      _
    // Predicated region
    $region10: #{run.1} parent=1 // pred_check
      _
    $region11: #{run.1} parent=1 // pred_check_branch
      %21 = sbr.rel (0) target = $region13
    $region12: #{run.1} parent=1 // pred_region
      _
    $region13: #{run.1} parent=1 // pred_fallthru
      _
    // Predicated region
    $region14: #{run.1} parent=1 // pred_check
      _
    $region15: #{run.1} parent=1 // pred_check_branch
      %23 = sbr.rel (0) target = $region17
    $region16: #{run.1} parent=1 // pred_region
      _
    $region17: #{run.1} parent=1 // pred_fallthru
      _
    // Predicated region
    $region18: #{run.1} parent=1 // pred_check
      _
    $region19: #{run.1} parent=1 // pred_check_branch
      %25 = sbr.rel (0) target = $region21
    $region20: #{run.1} parent=1 // pred_region
      _
    $region21: #{run.1} parent=1 // pred_fallthru
      _
    // Predicated region
    $region22: #{run.1} parent=1 // pred_check
      _
    $region23: #{run.1} parent=1 // pred_check_branch
      %27 = sbr.rel (0) target = $region25
    $region24: #{run.1} parent=1 // pred_region
      _
    $region25: #{run.1} parent=1 // pred_fallthru
      _
    // Predicated region
    $region26: #{run.1} parent=1 // pred_check
      _
    $region27: #{run.1} parent=1 // pred_check_branch
      %29 = sbr.rel (0) target = $region29
    $region28: #{run.1} parent=1 // pred_region
      _
    $region29: #{run.1} parent=1 // pred_fallthru
      _
    %v30 = vld [vmem:[%s2] sm:$0xff]
    %v31 = vld [vmem:[%s2 + $0x8] sm:$0xff]
    %v32 = vld [vmem:[%s2 + $0x10] sm:$0xff]
    %v33 = vld [vmem:[%s2 + $0x18] sm:$0xff]
    %v34 = vld [vmem:[%s1 + $0x2] sm:$0x1]
    %v35 = vld [vmem:[%s0] sm:$0xff]
    %v36 = vld [vmem:[%s0 + $0x8] sm:$0xff]
    %v37 = vld [vmem:[%s1] sm:$0x1]
    %v38 = vld [vmem:[%s1 + $0x1] sm:$0x1]
    %vm39 = vcmask 261120
    %v40 = vsel %vm39, %v35, 0.0
    %41 = vadd.xlane.f32.xlu0 %v40
    %v42 = vpop.xlane.xlu0 %41
    %v43 = vsel %vm39, %v36, 0.0
    %44 = vadd.xlane.f32.xlu0 %v43
    %v45 = vpop.xlane.xlu0 %44
    %v46 = vrcp.pop 32.0
    %v47 = vmul.f32 32.0, %v46
    %v48 = vsub.f32 1.0, %v47
    %v49 = vmul.f32 %v46, %v48
    %v50 = vadd.f32 %v46, %v49
    %vm51 = vweird.f32 %v46
    %v52 = vsel %vm51, %v46, %v50
    %v53 = vmul.f32 %v42, %v52
    %v54 = vmul.f32 %v45, %v52
    %v55 = vsub.f32 %v35, %v53
    %v56 = vsub.f32 %v36, %v54
    %v57 = vmul.f32 %v55, %v55
    %v58 = vmul.f32 %v56, %v56
    %v59 = vsel %vm39, %v57, 0.0
    %60 = vadd.xlane.f32.xlu0 %v59
    %v61 = vpop.xlane.xlu0 %60
    %v62 = vsel %vm39, %v58, 0.0
    %63 = vadd.xlane.f32.xlu0 %v62
    %v64 = vpop.xlane.xlu0 %63
    %v65 = vmul.f32 %v61, %v52
    %v66 = vmul.f32 %v64, %v52
    %v67 = vadd.f32 %v65, 1e-12
    %v68 = vadd.f32 %v66, 1e-12
    %v69 = vrsqrt.pop %v67
    %v70 = vmul.f32 %v69, %v67
    %v71 = vmul.f32 %v70, %v69
    %v72 = vmul.f32 0.5, %v71
    %v73 = vsub.f32 1.5, %v72
    %v74 = vmul.f32 %v69, %v73
    %vm75 = vweird.f32 %v67
    %vm76 = vweird.f32 %v69
    %vm77 = vmor %vm75, %vm76
    %v78 = vsel %vm77, %v69, %v74
    %v79 = vrsqrt.pop %v68
    %v80 = vmul.f32 %v79, %v68
    %v81 = vmul.f32 %v80, %v79
    %v82 = vmul.f32 0.5, %v81
    %v83 = vsub.f32 1.5, %v82
    %v84 = vmul.f32 %v79, %v83
    %vm85 = vweird.f32 %v68
    %vm86 = vweird.f32 %v79
    %vm87 = vmor %vm85, %vm86
    %v88 = vsel %vm87, %v79, %v84
    %v89 = vmul.f32 %v55, %v78
    %v90 = vmul.f32 %v56, %v88
    %v91 = vperm.slane %v37, 0
    %v92 = vmul.f32 %v89, %v91
    %v93 = vmul.f32 %v90, %v91
    %v94 = vperm.slane %v38, 0
    %v95 = vadd.f32 %v92, %v94
    %v96 = vadd.f32 %v93, %v94
    %v97 = vperm.slane %v34, 0
    %v99 = vsel %vm39, %v95, 0
    %v102 = vsel %vm39, %v96, 0
    %104 = vmatpush.msra.mxu0 0.0
    %105 = vmatpush.msra.mxu0 0.0
    %106 = vmatpush.msra.mxu0 0.0
    %107 = vmatpush.msra.mxu0 0.0
    %108 = vmatpush.msra.mxu0 0.0
    %109 = vmatpush.msra.mxu0 0.0
    %110 = vmatpush.msra.mxu0 0.0
    %111 = vmatpush.msra.mxu0 0.0
    %112 = vmatpush.msra.mxu0 0.0
    %113 = vmatpush.msra.mxu0 0.0
    %114 = vmatpush.msra.mxu0 0.0
    %115 = vmatpush.msra.mxu0 0.0
    %116 = vmatpush.msra.mxu0 %v33
    %117 = vmatpush.msra.mxu0 %v32
    %118 = vmatpush.msra.mxu0 %v31
    %119 = vmatpush.msra.mxu0 %v30
    %120 = vmatmul.f32.gmra.mxu0 %v99
    %v121 = vpop.f32.mrf.mxu0
    %v122 = vadd.f32 %v97, %v121
    %123 = vmatmul.f32.gmra.mxu0 %v102
    %v124 = vpop.f32.mrf.mxu0
    %v125 = vadd.f32 %v97, %v124
    %126 = vdwg.mxu0
    %vm127 = vcmask 392192
    %128 = vst.msk [vmem:[%s9] sm:$0xff] %vm127, %v122
    %129 = vst.msk [vmem:[%s9 + $0x8] sm:$0xff] %vm127, %v125
    %v130 = vld [vmem:[%s1 + $0x3] sm:$0x1]
    %v131 = vld [vmem:[%s1 + $0x4] sm:$0x1]
    %v132 = vld [vmem:[%s1 + $0x5] sm:$0x1]
    %v133 = vld [vmem:[%s1 + $0x6] sm:$0x1]
    %v134 = vld [vmem:[%s1 + $0x7] sm:$0x1]
    %v135 = vld [vmem:[%s1 + $0x8] sm:$0x1]
    %v136 = vld [vmem:[%s1 + $0x9] sm:$0x1]
    %v137 = vld [vmem:[%s1 + $0xa] sm:$0x1]
    %v138 = vld [vmem:[%s1 + $0xb] sm:$0x1]
    %v139 = vld [vmem:[%s1 + $0xc] sm:$0x1]
    %v140 = vld [vmem:[%s3] sm:$0xff]
    %v141 = vld [vmem:[%s3 + $0x8] sm:$0xff]
    %v142 = vld [vmem:[%s3 + $0x10] sm:$0xff]
    %v143 = vld [vmem:[%s3 + $0x18] sm:$0xff]
    %v144 = vperm.slane %v132, 0
    %145 = vmatpush.msra.mxu0 0.0
    %146 = vmatpush.msra.mxu0 0.0
    %147 = vmatpush.msra.mxu0 0.0
    %148 = vmatpush.msra.mxu0 0.0
    %149 = vmatpush.msra.mxu0 0.0
    %150 = vmatpush.msra.mxu0 0.0
    %151 = vmatpush.msra.mxu0 0.0
    %152 = vmatpush.msra.mxu0 0.0
    %153 = vmatpush.msra.mxu0 0.0
    %154 = vmatpush.msra.mxu0 0.0
    %155 = vmatpush.msra.mxu0 0.0
    %156 = vmatpush.msra.mxu0 0.0
    %157 = vmatpush.msra.mxu0 %v143
    %158 = vmatpush.msra.mxu0 %v142
    %159 = vmatpush.msra.mxu0 %v141
    %160 = vmatpush.msra.mxu0 %v140
    %161 = vmatmul.f32.gmra.mxu0 %v99
    %v162 = vpop.f32.mrf.mxu0
    %v163 = vadd.f32 %v144, %v162
    %164 = vmatmul.f32.gmra.mxu0 %v102
    %v165 = vpop.f32.mrf.mxu0
    %v166 = vadd.f32 %v144, %v165
    %167 = vdwg.mxu0
    %169 = vrot.lane.b32.xlu0 %v163, 96
    %v170 = vpop.permute.xlu0 %169
    %vm171 = vcmask 130048
    %v172 = vsel %vm171, %v163, 0
    %v174 = vsel %vm171, %v170, 0
    %176 = vmatpush.xpose.msra.mxu0 0.0
    %177 = vmatpush.xpose.msra.mxu0 0.0
    %178 = vmatpush.xpose.msra.mxu0 0.0
    %179 = vmatpush.xpose.msra.mxu0 0.0
    %180 = vmatpush.xpose.msra.mxu0 0.0
    %181 = vmatpush.xpose.msra.mxu0 0.0
    %182 = vmatpush.xpose.msra.mxu0 0.0
    %183 = vmatpush.xpose.msra.mxu0 0.0
    %184 = vmatpush.xpose.msra.mxu0 0.0
    %185 = vmatpush.xpose.msra.mxu0 0.0
    %186 = vmatpush.xpose.msra.mxu0 0.0
    %187 = vmatpush.xpose.msra.mxu0 0.0
    %188 = vmatpush.xpose.msra.mxu0 0.0
    %189 = vmatpush.xpose.msra.mxu0 0.0
    %190 = vmatpush.xpose.msra.mxu0 0.0
    %191 = vmatpush.xpose.msra.mxu0 %v174
    %192 = vmatmul.f32.gmra.mxu0 %v172
    %v193 = vpop.f32.mrf.mxu0
    %v194 = vadd.f32 0.0, %v193
    %195 = vdwg.mxu0
    %v196 = vmul.f32 %v194, 0.25
    %v197 = vperm.slane %v130, 0
    %v198 = vadd.f32 %v196, %v197
    %vm199 = vcmask 64512
    %200 = vst.msk [vmem:[%s8] sm:$0xff] %vm199, %v198
    %v201 = vsel %vm199, %v198, -inf
    %202 = vmax.xlane.f32.xlu0 %v201
    %v203 = vpop.xlane.xlu0 %202
    %v204 = vsub.f32 %v198, %v203
    %v205 = vmul.f32 %v204, 1.442695
    %v206 = vpow.pop %v205
    %v207 = vsel %vm199, %v206, 0.0
    %208 = vadd.xlane.f32.xlu0 %v207
    %v209 = vpop.xlane.xlu0 %208
    %v210 = vrcp.pop %v209
    %v211 = vmul.f32 %v206, %v210
    %212 = vrot.lane.b32.xlu0 %v163, 64
    %v213 = vpop.permute.xlu0 %212
    %v216 = vsel %vm199, %v211, 0
    %218 = vmatpush.msra.mxu0 0.0
    %219 = vmatpush.msra.mxu0 0.0
    %220 = vmatpush.msra.mxu0 0.0
    %221 = vmatpush.msra.mxu0 0.0
    %222 = vmatpush.msra.mxu0 0.0
    %223 = vmatpush.msra.mxu0 0.0
    %224 = vmatpush.msra.mxu0 0.0
    %225 = vmatpush.msra.mxu0 0.0
    %226 = vmatpush.msra.mxu0 0.0
    %227 = vmatpush.msra.mxu0 0.0
    %228 = vmatpush.msra.mxu0 0.0
    %229 = vmatpush.msra.mxu0 0.0
    %230 = vmatpush.msra.mxu0 0.0
    %231 = vmatpush.msra.mxu0 0.0
    %232 = vmatpush.msra.mxu0 0.0
    %233 = vmatpush.msra.mxu0 %v213
    %234 = vmatmul.f32.gmra.mxu0 %v216
    %v235 = vpop.f32.mrf.mxu0
    %v236 = vadd.f32 0.0, %v235
    %237 = vdwg.mxu0
    %238 = vrot.lane.b32.xlu0 %v163, 112
    %v239 = vpop.permute.xlu0 %238
    %240 = vrot.lane.b32.xlu0 %v163, 80
    %v241 = vpop.permute.xlu0 %240
    %v242 = vsel %vm171, %v239, 0
    %v244 = vsel %vm171, %v241, 0
    %246 = vmatpush.xpose.msra.mxu0 0.0
    %247 = vmatpush.xpose.msra.mxu0 0.0
    %248 = vmatpush.xpose.msra.mxu0 0.0
    %249 = vmatpush.xpose.msra.mxu0 0.0
    %250 = vmatpush.xpose.msra.mxu0 0.0
    %251 = vmatpush.xpose.msra.mxu0 0.0
    %252 = vmatpush.xpose.msra.mxu0 0.0
    %253 = vmatpush.xpose.msra.mxu0 0.0
    %254 = vmatpush.xpose.msra.mxu0 0.0
    %255 = vmatpush.xpose.msra.mxu0 0.0
    %256 = vmatpush.xpose.msra.mxu0 0.0
    %257 = vmatpush.xpose.msra.mxu0 0.0
    %258 = vmatpush.xpose.msra.mxu0 0.0
    %259 = vmatpush.xpose.msra.mxu0 0.0
    %260 = vmatpush.xpose.msra.mxu0 0.0
    %261 = vmatpush.xpose.msra.mxu0 %v244
    %262 = vmatmul.f32.gmra.mxu0 %v242
    %v263 = vpop.f32.mrf.mxu0
    %v264 = vadd.f32 0.0, %v263
    %265 = vdwg.mxu0
    %v266 = vmul.f32 %v264, 0.25
    %v267 = vadd.f32 %v266, %v197
    %s268 = scalar_lea.vmem %s8, 8
    %269 = vst.msk [vmem:[%s268] sm:$0xff] %vm199, %v267
    %v270 = vsel %vm199, %v267, -inf
    %271 = vmax.xlane.f32.xlu0 %v270
    %v272 = vpop.xlane.xlu0 %271
    %v273 = vsub.f32 %v267, %v272
    %v274 = vmul.f32 %v273, 1.442695
    %v275 = vpow.pop %v274
    %v276 = vsel %vm199, %v275, 0.0
    %277 = vadd.xlane.f32.xlu0 %v276
    %v278 = vpop.xlane.xlu0 %277
    %v279 = vrcp.pop %v278
    %v280 = vmul.f32 %v275, %v279
    %281 = vrot.lane.b32.xlu0 %v163, 48
    %v282 = vpop.permute.xlu0 %281
    %v285 = vsel %vm199, %v280, 0
    %287 = vmatpush.msra.mxu0 0.0
    %288 = vmatpush.msra.mxu0 0.0
    %289 = vmatpush.msra.mxu0 0.0
    %290 = vmatpush.msra.mxu0 0.0
    %291 = vmatpush.msra.mxu0 0.0
    %292 = vmatpush.msra.mxu0 0.0
    %293 = vmatpush.msra.mxu0 0.0
    %294 = vmatpush.msra.mxu0 0.0
    %295 = vmatpush.msra.mxu0 0.0
    %296 = vmatpush.msra.mxu0 0.0
    %297 = vmatpush.msra.mxu0 0.0
    %298 = vmatpush.msra.mxu0 0.0
    %299 = vmatpush.msra.mxu0 0.0
    %300 = vmatpush.msra.mxu0 0.0
    %301 = vmatpush.msra.mxu0 0.0
    %302 = vmatpush.msra.mxu0 %v282
    %303 = vmatmul.f32.gmra.mxu0 %v285
    %v304 = vpop.f32.mrf.mxu0
    %v305 = vadd.f32 0.0, %v304
    %306 = vdwg.mxu0
    %308 = vrot.lane.b32.xlu0 %v305, 16
    %v309 = vpop.permute.xlu0 %308
    %v311 = vsel %vm171, %v236, %v309
    %313 = vrot.lane.b32.xlu0 %v166, 96
    %v314 = vpop.permute.xlu0 %313
    %v315 = vsel %vm171, %v166, 0
    %v317 = vsel %vm171, %v314, 0
    %319 = vmatpush.xpose.msra.mxu0 0.0
    %320 = vmatpush.xpose.msra.mxu0 0.0
    %321 = vmatpush.xpose.msra.mxu0 0.0
    %322 = vmatpush.xpose.msra.mxu0 0.0
    %323 = vmatpush.xpose.msra.mxu0 0.0
    %324 = vmatpush.xpose.msra.mxu0 0.0
    %325 = vmatpush.xpose.msra.mxu0 0.0
    %326 = vmatpush.xpose.msra.mxu0 0.0
    %327 = vmatpush.xpose.msra.mxu0 0.0
    %328 = vmatpush.xpose.msra.mxu0 0.0
    %329 = vmatpush.xpose.msra.mxu0 0.0
    %330 = vmatpush.xpose.msra.mxu0 0.0
    %331 = vmatpush.xpose.msra.mxu0 0.0
    %332 = vmatpush.xpose.msra.mxu0 0.0
    %333 = vmatpush.xpose.msra.mxu0 0.0
    %334 = vmatpush.xpose.msra.mxu0 %v317
    %335 = vmatmul.f32.gmra.mxu0 %v315
    %v336 = vpop.f32.mrf.mxu0
    %v337 = vadd.f32 0.0, %v336
    %338 = vdwg.mxu0
    %v339 = vmul.f32 %v337, 0.25
    %v340 = vperm.slane %v131, 0
    %v341 = vadd.f32 %v339, %v340
    %s342 = scalar_lea.vmem %s8, 16
    %343 = vst.msk [vmem:[%s342] sm:$0xff] %vm199, %v341
    %v344 = vsel %vm199, %v341, -inf
    %345 = vmax.xlane.f32.xlu0 %v344
    %v346 = vpop.xlane.xlu0 %345
    %v347 = vsub.f32 %v341, %v346
    %v348 = vmul.f32 %v347, 1.442695
    %v349 = vpow.pop %v348
    %v350 = vsel %vm199, %v349, 0.0
    %351 = vadd.xlane.f32.xlu0 %v350
    %v352 = vpop.xlane.xlu0 %351
    %v353 = vrcp.pop %v352
    %v354 = vmul.f32 %v349, %v353
    %355 = vrot.lane.b32.xlu0 %v166, 64
    %v356 = vpop.permute.xlu0 %355
    %v359 = vsel %vm199, %v354, 0
    %361 = vmatpush.msra.mxu0 0.0
    %362 = vmatpush.msra.mxu0 0.0
    %363 = vmatpush.msra.mxu0 0.0
    %364 = vmatpush.msra.mxu0 0.0
    %365 = vmatpush.msra.mxu0 0.0
    %366 = vmatpush.msra.mxu0 0.0
    %367 = vmatpush.msra.mxu0 0.0
    %368 = vmatpush.msra.mxu0 0.0
    %369 = vmatpush.msra.mxu0 0.0
    %370 = vmatpush.msra.mxu0 0.0
    %371 = vmatpush.msra.mxu0 0.0
    %372 = vmatpush.msra.mxu0 0.0
    %373 = vmatpush.msra.mxu0 0.0
    %374 = vmatpush.msra.mxu0 0.0
    %375 = vmatpush.msra.mxu0 0.0
    %376 = vmatpush.msra.mxu0 %v356
    %377 = vmatmul.f32.gmra.mxu0 %v359
    %v378 = vpop.f32.mrf.mxu0
    %v379 = vadd.f32 0.0, %v378
    %380 = vdwg.mxu0
    %381 = vrot.lane.b32.xlu0 %v166, 112
    %v382 = vpop.permute.xlu0 %381
    %383 = vrot.lane.b32.xlu0 %v166, 80
    %v384 = vpop.permute.xlu0 %383
    %v385 = vsel %vm171, %v382, 0
    %v387 = vsel %vm171, %v384, 0
    %389 = vmatpush.xpose.msra.mxu0 0.0
    %390 = vmatpush.xpose.msra.mxu0 0.0
    %391 = vmatpush.xpose.msra.mxu0 0.0
    %392 = vmatpush.xpose.msra.mxu0 0.0
    %393 = vmatpush.xpose.msra.mxu0 0.0
    %394 = vmatpush.xpose.msra.mxu0 0.0
    %395 = vmatpush.xpose.msra.mxu0 0.0
    %396 = vmatpush.xpose.msra.mxu0 0.0
    %397 = vmatpush.xpose.msra.mxu0 0.0
    %398 = vmatpush.xpose.msra.mxu0 0.0
    %399 = vmatpush.xpose.msra.mxu0 0.0
    %400 = vmatpush.xpose.msra.mxu0 0.0
    %401 = vmatpush.xpose.msra.mxu0 0.0
    %402 = vmatpush.xpose.msra.mxu0 0.0
    %403 = vmatpush.xpose.msra.mxu0 0.0
    %404 = vmatpush.xpose.msra.mxu0 %v387
    %405 = vmatmul.f32.gmra.mxu0 %v385
    %v406 = vpop.f32.mrf.mxu0
    %v407 = vadd.f32 0.0, %v406
    %408 = vdwg.mxu0
    %v409 = vmul.f32 %v407, 0.25
    %v410 = vadd.f32 %v409, %v340
    %s411 = scalar_lea.vmem %s8, 24
    %412 = vst.msk [vmem:[%s411] sm:$0xff] %vm199, %v410
    %v413 = vsel %vm199, %v410, -inf
    %414 = vmax.xlane.f32.xlu0 %v413
    %v415 = vpop.xlane.xlu0 %414
    %v416 = vsub.f32 %v410, %v415
    %v417 = vmul.f32 %v416, 1.442695
    %v418 = vpow.pop %v417
    %v419 = vsel %vm199, %v418, 0.0
    %420 = vadd.xlane.f32.xlu0 %v419
    %v421 = vpop.xlane.xlu0 %420
    %v422 = vrcp.pop %v421
    %v423 = vmul.f32 %v418, %v422
    %424 = vrot.lane.b32.xlu0 %v166, 48
    %v425 = vpop.permute.xlu0 %424
    %v428 = vsel %vm199, %v423, 0
    %430 = vmatpush.msra.mxu0 0.0
    %431 = vmatpush.msra.mxu0 0.0
    %432 = vmatpush.msra.mxu0 0.0
    %433 = vmatpush.msra.mxu0 0.0
    %434 = vmatpush.msra.mxu0 0.0
    %435 = vmatpush.msra.mxu0 0.0
    %436 = vmatpush.msra.mxu0 0.0
    %437 = vmatpush.msra.mxu0 0.0
    %438 = vmatpush.msra.mxu0 0.0
    %439 = vmatpush.msra.mxu0 0.0
    %440 = vmatpush.msra.mxu0 0.0
    %441 = vmatpush.msra.mxu0 0.0
    %442 = vmatpush.msra.mxu0 0.0
    %443 = vmatpush.msra.mxu0 0.0
    %444 = vmatpush.msra.mxu0 0.0
    %445 = vmatpush.msra.mxu0 %v425
    %446 = vmatmul.f32.gmra.mxu0 %v428
    %v447 = vpop.f32.mrf.mxu0
    %v448 = vadd.f32 0.0, %v447
    %449 = vdwg.mxu0
    %451 = vrot.lane.b32.xlu0 %v448, 16
    %v452 = vpop.permute.xlu0 %451
    %v454 = vsel %vm171, %v379, %v452
    %v455 = vld [vmem:[%s4] sm:$0xff]
    %v456 = vld [vmem:[%s4 + $0x8] sm:$0xff]
    %v457 = vld [vmem:[%s4 + $0x10] sm:$0xff]
    %v458 = vld [vmem:[%s4 + $0x18] sm:$0xff]
    %v459 = vperm.slane %v133, 0
    %v461 = vsel %vm39, %v311, 0
    %v464 = vsel %vm39, %v454, 0
    %466 = vmatpush.msra.mxu0 0.0
    %467 = vmatpush.msra.mxu0 0.0
    %468 = vmatpush.msra.mxu0 0.0
    %469 = vmatpush.msra.mxu0 0.0
    %470 = vmatpush.msra.mxu0 0.0
    %471 = vmatpush.msra.mxu0 0.0
    %472 = vmatpush.msra.mxu0 0.0
    %473 = vmatpush.msra.mxu0 0.0
    %474 = vmatpush.msra.mxu0 0.0
    %475 = vmatpush.msra.mxu0 0.0
    %476 = vmatpush.msra.mxu0 0.0
    %477 = vmatpush.msra.mxu0 0.0
    %478 = vmatpush.msra.mxu0 %v458
    %479 = vmatpush.msra.mxu0 %v457
    %480 = vmatpush.msra.mxu0 %v456
    %481 = vmatpush.msra.mxu0 %v455
    %482 = vmatmul.f32.gmra.mxu0 %v461
    %v483 = vpop.f32.mrf.mxu0
    %v484 = vadd.f32 %v459, %v483
    %485 = vmatmul.f32.gmra.mxu0 %v464
    %v486 = vpop.f32.mrf.mxu0
    %v487 = vadd.f32 %v459, %v486
    %488 = vdwg.mxu0
    %v489 = vadd.f32 %v484, %v95
    %v490 = vadd.f32 %v487, %v96
    %v491 = vsel %vm39, %v489, 0.0
    %492 = vadd.xlane.f32.xlu0 %v491
    %v493 = vpop.xlane.xlu0 %492
    %v494 = vsel %vm39, %v490, 0.0
    %495 = vadd.xlane.f32.xlu0 %v494
    %v496 = vpop.xlane.xlu0 %495
    %v497 = vmul.f32 %v493, %v52
    %v498 = vmul.f32 %v496, %v52
    %v499 = vsub.f32 %v489, %v497
    %v500 = vsub.f32 %v490, %v498
    %v501 = vmul.f32 %v499, %v499
    %v502 = vmul.f32 %v500, %v500
    %v503 = vsel %vm39, %v501, 0.0
    %504 = vadd.xlane.f32.xlu0 %v503
    %v505 = vpop.xlane.xlu0 %504
    %v506 = vsel %vm39, %v502, 0.0
    %507 = vadd.xlane.f32.xlu0 %v506
    %v508 = vpop.xlane.xlu0 %507
    %v509 = vmul.f32 %v505, %v52
    %v510 = vmul.f32 %v508, %v52
    %v511 = vadd.f32 %v509, 1e-12
    %v512 = vadd.f32 %v510, 1e-12
    %v513 = vrsqrt.pop %v511
    %v514 = vmul.f32 %v513, %v511
    %v515 = vmul.f32 %v514, %v513
    %v516 = vmul.f32 0.5, %v515
    %v517 = vsub.f32 1.5, %v516
    %v518 = vmul.f32 %v513, %v517
    %vm519 = vweird.f32 %v511
    %vm520 = vweird.f32 %v513
    %vm521 = vmor %vm519, %vm520
    %v522 = vsel %vm521, %v513, %v518
    %v523 = vrsqrt.pop %v512
    %v524 = vmul.f32 %v523, %v512
    %v525 = vmul.f32 %v524, %v523
    %v526 = vmul.f32 0.5, %v525
    %v527 = vsub.f32 1.5, %v526
    %v528 = vmul.f32 %v523, %v527
    %vm529 = vweird.f32 %v512
    %vm530 = vweird.f32 %v523
    %vm531 = vmor %vm529, %vm530
    %v532 = vsel %vm531, %v523, %v528
    %v533 = vmul.f32 %v499, %v522
    %v534 = vmul.f32 %v500, %v532
    %v535 = vperm.slane %v134, 0
    %v536 = vmul.f32 %v533, %v535
    %v537 = vmul.f32 %v534, %v535
    %v538 = vperm.slane %v135, 0
    %v539 = vadd.f32 %v536, %v538
    %v540 = vadd.f32 %v537, %v538
    %v541 = vld [vmem:[%s5] sm:$0xff]
    %v542 = vld [vmem:[%s5 + $0x8] sm:$0xff]
    %v543 = vld [vmem:[%s5 + $0x10] sm:$0xff]
    %v544 = vld [vmem:[%s5 + $0x18] sm:$0xff]
    %v545 = vperm.slane %v136, 0
    %v547 = vsel %vm39, %v539, 0
    %v550 = vsel %vm39, %v540, 0
    %552 = vmatpush.msra.mxu0 0.0
    %553 = vmatpush.msra.mxu0 0.0
    %554 = vmatpush.msra.mxu0 0.0
    %555 = vmatpush.msra.mxu0 0.0
    %556 = vmatpush.msra.mxu0 0.0
    %557 = vmatpush.msra.mxu0 0.0
    %558 = vmatpush.msra.mxu0 0.0
    %559 = vmatpush.msra.mxu0 0.0
    %560 = vmatpush.msra.mxu0 0.0
    %561 = vmatpush.msra.mxu0 0.0
    %562 = vmatpush.msra.mxu0 0.0
    %563 = vmatpush.msra.mxu0 0.0
    %564 = vmatpush.msra.mxu0 %v544
    %565 = vmatpush.msra.mxu0 %v543
    %566 = vmatpush.msra.mxu0 %v542
    %567 = vmatpush.msra.mxu0 %v541
    %568 = vmatmul.f32.gmra.mxu0 %v547
    %v569 = vpop.f32.mrf.mxu0
    %v570 = vadd.f32 %v545, %v569
    %571 = vmatmul.f32.gmra.mxu0 %v550
    %v572 = vpop.f32.mrf.mxu0
    %v573 = vadd.f32 %v545, %v572
    %574 = vdwg.mxu0
    %v575 = vmul.f32 %v570, 0.5
    %v576 = vmul.f32 %v573, 0.5
    %v577 = vmul.f32 %v570, 0.70710677
    %v578 = vmul.f32 %v573, 0.70710677
    %v579 = vmul.f32 %v577, %v577
    %v580 = vmin.f32 16.0, %v579
    %v581 = vmul.f32 %v580, 2.1237322e-06
    %v582 = vadd.f32 %v581, 0.00028619796
    %v583 = vmul.f32 %v580, %v582
    %v584 = vadd.f32 %v583, 0.0036580483
    %v585 = vmul.f32 %v580, %v584
    %v586 = vadd.f32 %v585, 0.05243302
    %v587 = vmul.f32 %v580, %v586
    %v588 = vadd.f32 %v587, 0.18741608
    %v589 = vmul.f32 %v580, %v588
    %v590 = vadd.f32 %v589, 1.1283791
    %v591 = vmul.f32 %v577, %v590
    %v592 = vmul.f32 %v580, 3.8918573e-05
    %v593 = vadd.f32 %v592, 0.001143296
    %v594 = vmul.f32 %v580, %v593
    %v595 = vadd.f32 %v594, 0.014752088
    %v596 = vmul.f32 %v580, %v595
    %v597 = vadd.f32 %v596, 0.112945676
    %v598 = vmul.f32 %v580, %v597
    %v599 = vadd.f32 %v598, 0.4994258
    %v600 = vmul.f32 %v580, %v599
    %v601 = vadd.f32 %v600, 1.0
    %v602 = vrcp.pop %v601
    %v603 = vmul.f32 %v601, %v602
    %v604 = vsub.f32 1.0, %v603
    %v605 = vmul.f32 %v602, %v604
    %v606 = vadd.f32 %v602, %v605
    %vm607 = vweird.f32 %v601
    %vm608 = vweird.f32 %v602
    %vm609 = vmor %vm607, %vm608
    %v610 = vsel %vm609, %v602, %v606
    %v611 = vand.u32 2147483647, %v601
    %vm612 = vcmp.eq.f32.partialorder %v611, 8.507059e+37
    %v613 = vand.u32 %v601, 2147483648
    %v614 = vor.u32 1.1754944e-38, %v613
    %v615 = vsel %vm612, %v614, %v610
    %v616 = vmul.f32 %v591, %v615
    %v617 = vmin.f32 %v616, 1.0
    %v618 = vmax.f32 %v617, -1.0
    %v619 = vmul.f32 %v578, %v578
    %v620 = vmin.f32 16.0, %v619
    %v621 = vmul.f32 %v620, 2.1237322e-06
    %v622 = vadd.f32 %v621, 0.00028619796
    %v623 = vmul.f32 %v620, %v622
    %v624 = vadd.f32 %v623, 0.0036580483
    %v625 = vmul.f32 %v620, %v624
    %v626 = vadd.f32 %v625, 0.05243302
    %v627 = vmul.f32 %v620, %v626
    %v628 = vadd.f32 %v627, 0.18741608
    %v629 = vmul.f32 %v620, %v628
    %v630 = vadd.f32 %v629, 1.1283791
    %v631 = vmul.f32 %v578, %v630
    %v632 = vmul.f32 %v620, 3.8918573e-05
    %v633 = vadd.f32 %v632, 0.001143296
    %v634 = vmul.f32 %v620, %v633
    %v635 = vadd.f32 %v634, 0.014752088
    %v636 = vmul.f32 %v620, %v635
    %v637 = vadd.f32 %v636, 0.112945676
    %v638 = vmul.f32 %v620, %v637
    %v639 = vadd.f32 %v638, 0.4994258
    %v640 = vmul.f32 %v620, %v639
    %v641 = vadd.f32 %v640, 1.0
    %v642 = vrcp.pop %v641
    %v643 = vmul.f32 %v641, %v642
    %v644 = vsub.f32 1.0, %v643
    %v645 = vmul.f32 %v642, %v644
    %v646 = vadd.f32 %v642, %v645
    %vm647 = vweird.f32 %v641
    %vm648 = vweird.f32 %v642
    %vm649 = vmor %vm647, %vm648
    %v650 = vsel %vm649, %v642, %v646
    %v651 = vand.u32 2147483647, %v641
    %vm652 = vcmp.eq.f32.partialorder %v651, 8.507059e+37
    %v653 = vand.u32 %v641, 2147483648
    %v654 = vor.u32 1.1754944e-38, %v653
    %v655 = vsel %vm652, %v654, %v650
    %v656 = vmul.f32 %v631, %v655
    %v657 = vmin.f32 %v656, 1.0
    %v658 = vmax.f32 %v657, -1.0
    %v659 = vadd.f32 %v618, 1.0
    %v660 = vadd.f32 %v658, 1.0
    %v661 = vmul.f32 %v575, %v659
    %v662 = vmul.f32 %v576, %v660
    %v663 = vld [vmem:[%s6] sm:$0xff]
    %v664 = vld [vmem:[%s6 + $0x8] sm:$0xff]
    %v665 = vld [vmem:[%s6 + $0x10] sm:$0xff]
    %v666 = vld [vmem:[%s6 + $0x18] sm:$0xff]
    %v667 = vld [vmem:[%s6 + $0x20] sm:$0xff]
    %v668 = vld [vmem:[%s6 + $0x28] sm:$0xff]
    %v669 = vld [vmem:[%s6 + $0x30] sm:$0xff]
    %v670 = vld [vmem:[%s6 + $0x38] sm:$0xff]
    %v671 = vperm.slane %v137, 0
    %vm672 = vcmask 523264
    %v674 = vsel %vm672, %v661, 0
    %v677 = vsel %vm672, %v662, 0
    %679 = vmatpush.msra.mxu0 0.0
    %680 = vmatpush.msra.mxu0 0.0
    %681 = vmatpush.msra.mxu0 0.0
    %682 = vmatpush.msra.mxu0 0.0
    %683 = vmatpush.msra.mxu0 0.0
    %684 = vmatpush.msra.mxu0 0.0
    %685 = vmatpush.msra.mxu0 0.0
    %686 = vmatpush.msra.mxu0 0.0
    %687 = vmatpush.msra.mxu0 %v670
    %688 = vmatpush.msra.mxu0 %v669
    %689 = vmatpush.msra.mxu0 %v668
    %690 = vmatpush.msra.mxu0 %v667
    %691 = vmatpush.msra.mxu0 %v666
    %692 = vmatpush.msra.mxu0 %v665
    %693 = vmatpush.msra.mxu0 %v664
    %694 = vmatpush.msra.mxu0 %v663
    %695 = vmatmul.f32.gmra.mxu0 %v674
    %v696 = vpop.f32.mrf.mxu0
    %v697 = vadd.f32 %v671, %v696
    %698 = vmatmul.f32.gmra.mxu0 %v677
    %v699 = vpop.f32.mrf.mxu0
    %v700 = vadd.f32 %v671, %v699
    %701 = vdwg.mxu0
    %v702 = vadd.f32 %v697, %v539
    %v703 = vadd.f32 %v700, %v540
    %v704 = vsel %vm39, %v702, 0.0
    %705 = vadd.xlane.f32.xlu0 %v704
    %v706 = vpop.xlane.xlu0 %705
    %v707 = vsel %vm39, %v703, 0.0
    %708 = vadd.xlane.f32.xlu0 %v707
    %v709 = vpop.xlane.xlu0 %708
    %v710 = vmul.f32 %v706, %v52
    %v711 = vmul.f32 %v709, %v52
    %v712 = vsub.f32 %v702, %v710
    %v713 = vsub.f32 %v703, %v711
    %v714 = vmul.f32 %v712, %v712
    %v715 = vmul.f32 %v713, %v713
    %v716 = vsel %vm39, %v714, 0.0
    %717 = vadd.xlane.f32.xlu0 %v716
    %v718 = vpop.xlane.xlu0 %717
    %v719 = vsel %vm39, %v715, 0.0
    %720 = vadd.xlane.f32.xlu0 %v719
    %v721 = vpop.xlane.xlu0 %720
    %v722 = vmul.f32 %v718, %v52
    %v723 = vmul.f32 %v721, %v52
    %v724 = vadd.f32 %v722, 1e-12
    %v725 = vadd.f32 %v723, 1e-12
    %v726 = vrsqrt.pop %v724
    %v727 = vmul.f32 %v726, %v724
    %v728 = vmul.f32 %v727, %v726
    %v729 = vmul.f32 0.5, %v728
    %v730 = vsub.f32 1.5, %v729
    %v731 = vmul.f32 %v726, %v730
    %vm732 = vweird.f32 %v724
    %vm733 = vweird.f32 %v726
    %vm734 = vmor %vm732, %vm733
    %v735 = vsel %vm734, %v726, %v731
    %v736 = vrsqrt.pop %v725
    %v737 = vmul.f32 %v736, %v725
    %v738 = vmul.f32 %v737, %v736
    %v739 = vmul.f32 0.5, %v738
    %v740 = vsub.f32 1.5, %v739
    %v741 = vmul.f32 %v736, %v740
    %vm742 = vweird.f32 %v725
    %vm743 = vweird.f32 %v736
    %vm744 = vmor %vm742, %vm743
    %v745 = vsel %vm744, %v736, %v741
    %v746 = vmul.f32 %v712, %v735
    %v747 = vmul.f32 %v713, %v745
    %v748 = vperm.slane %v138, 0
    %v749 = vmul.f32 %v746, %v748
    %v750 = vmul.f32 %v747, %v748
    %v751 = vperm.slane %v139, 0
    %v752 = vadd.f32 %v749, %v751
    %v753 = vadd.f32 %v750, %v751
    %v755 = vsel %vm39, %v752, 0
    %v758 = vsel %vm39, %v753, 0
    %760 = vmatpush.msra.mxu0 0.0
    %761 = vmatpush.msra.mxu0 0.0
    %762 = vmatpush.msra.mxu0 0.0
    %763 = vmatpush.msra.mxu0 0.0
    %764 = vmatpush.msra.mxu0 0.0
    %765 = vmatpush.msra.mxu0 0.0
    %766 = vmatpush.msra.mxu0 0.0
    %767 = vmatpush.msra.mxu0 0.0
    %768 = vmatpush.msra.mxu0 0.0
    %769 = vmatpush.msra.mxu0 0.0
    %770 = vmatpush.msra.mxu0 0.0
    %771 = vmatpush.msra.mxu0 0.0
    %772 = vmatpush.msra.mxu0 %v33
    %773 = vmatpush.msra.mxu0 %v32
    %774 = vmatpush.msra.mxu0 %v31
    %775 = vmatpush.msra.mxu0 %v30
    %776 = vmatmul.f32.gmra.mxu0 %v755
    %v777 = vpop.f32.mrf.mxu0
    %v778 = vadd.f32 %v97, %v777
    %779 = vmatmul.f32.gmra.mxu0 %v758
    %v780 = vpop.f32.mrf.mxu0
    %v781 = vadd.f32 %v97, %v780
    %782 = vdwg.mxu0
    %783 = vst.msk [vmem:[%s9 + $0x10] sm:$0xff] %vm127, %v778
    %784 = vst.msk [vmem:[%s9 + $0x18] sm:$0xff] %vm127, %v781
    %v785 = vld [vmem:[%s1 + $0xd] sm:$0x1]
    %v786 = vld [vmem:[%s1 + $0xe] sm:$0x1]
    %v787 = vld [vmem:[%s1 + $0xf] sm:$0x1]
    %v788 = vld [vmem:[%s1 + $0x10] sm:$0x1]
    %v789 = vld [vmem:[%s1 + $0x11] sm:$0x1]
    %v790 = vld [vmem:[%s1 + $0x12] sm:$0x1]
    %v791 = vld [vmem:[%s1 + $0x13] sm:$0x1]
    %v792 = vld [vmem:[%s1 + $0x14] sm:$0x1]
    %s793 = scalar_lea.vmem %s3, 32
    %v794 = vld [vmem:[%s793] sm:$0xff]
    %v795 = vld [vmem:[%s793 + $0x8] sm:$0xff]
    %v796 = vld [vmem:[%s793 + $0x10] sm:$0xff]
    %v797 = vld [vmem:[%s793 + $0x18] sm:$0xff]
    %v798 = vperm.slane %v785, 0
    %799 = vmatpush.msra.mxu0 0.0
    %800 = vmatpush.msra.mxu0 0.0
    %801 = vmatpush.msra.mxu0 0.0
    %802 = vmatpush.msra.mxu0 0.0
    %803 = vmatpush.msra.mxu0 0.0
    %804 = vmatpush.msra.mxu0 0.0
    %805 = vmatpush.msra.mxu0 0.0
    %806 = vmatpush.msra.mxu0 0.0
    %807 = vmatpush.msra.mxu0 0.0
    %808 = vmatpush.msra.mxu0 0.0
    %809 = vmatpush.msra.mxu0 0.0
    %810 = vmatpush.msra.mxu0 0.0
    %811 = vmatpush.msra.mxu0 %v797
    %812 = vmatpush.msra.mxu0 %v796
    %813 = vmatpush.msra.mxu0 %v795
    %814 = vmatpush.msra.mxu0 %v794
    %815 = vmatmul.f32.gmra.mxu0 %v755
    %v816 = vpop.f32.mrf.mxu0
    %v817 = vadd.f32 %v798, %v816
    %818 = vmatmul.f32.gmra.mxu0 %v758
    %v819 = vpop.f32.mrf.mxu0
    %v820 = vadd.f32 %v798, %v819
    %821 = vdwg.mxu0
    %823 = vrot.lane.b32.xlu0 %v817, 96
    %v824 = vpop.permute.xlu0 %823
    %v825 = vsel %vm171, %v817, 0
    %v827 = vsel %vm171, %v824, 0
    %829 = vmatpush.xpose.msra.mxu0 0.0
    %830 = vmatpush.xpose.msra.mxu0 0.0
    %831 = vmatpush.xpose.msra.mxu0 0.0
    %832 = vmatpush.xpose.msra.mxu0 0.0
    %833 = vmatpush.xpose.msra.mxu0 0.0
    %834 = vmatpush.xpose.msra.mxu0 0.0
    %835 = vmatpush.xpose.msra.mxu0 0.0
    %836 = vmatpush.xpose.msra.mxu0 0.0
    %837 = vmatpush.xpose.msra.mxu0 0.0
    %838 = vmatpush.xpose.msra.mxu0 0.0
    %839 = vmatpush.xpose.msra.mxu0 0.0
    %840 = vmatpush.xpose.msra.mxu0 0.0
    %841 = vmatpush.xpose.msra.mxu0 0.0
    %842 = vmatpush.xpose.msra.mxu0 0.0
    %843 = vmatpush.xpose.msra.mxu0 0.0
    %844 = vmatpush.xpose.msra.mxu0 %v827
    %845 = vmatmul.f32.gmra.mxu0 %v825
    %v846 = vpop.f32.mrf.mxu0
    %v847 = vadd.f32 0.0, %v846
    %848 = vdwg.mxu0
    %v849 = vmul.f32 %v847, 0.25
    %v850 = vadd.f32 %v849, %v197
    %s851 = scalar_lea.vmem %s8, 32
    %852 = vst.msk [vmem:[%s851] sm:$0xff] %vm199, %v850
    %v853 = vsel %vm199, %v850, -inf
    %854 = vmax.xlane.f32.xlu0 %v853
    %v855 = vpop.xlane.xlu0 %854
    %v856 = vsub.f32 %v850, %v855
    %v857 = vmul.f32 %v856, 1.442695
    %v858 = vpow.pop %v857
    %v859 = vsel %vm199, %v858, 0.0
    %860 = vadd.xlane.f32.xlu0 %v859
    %v861 = vpop.xlane.xlu0 %860
    %v862 = vrcp.pop %v861
    %v863 = vmul.f32 %v858, %v862
    %864 = vrot.lane.b32.xlu0 %v817, 64
    %v865 = vpop.permute.xlu0 %864
    %v868 = vsel %vm199, %v863, 0
    %870 = vmatpush.msra.mxu0 0.0
    %871 = vmatpush.msra.mxu0 0.0
    %872 = vmatpush.msra.mxu0 0.0
    %873 = vmatpush.msra.mxu0 0.0
    %874 = vmatpush.msra.mxu0 0.0
    %875 = vmatpush.msra.mxu0 0.0
    %876 = vmatpush.msra.mxu0 0.0
    %877 = vmatpush.msra.mxu0 0.0
    %878 = vmatpush.msra.mxu0 0.0
    %879 = vmatpush.msra.mxu0 0.0
    %880 = vmatpush.msra.mxu0 0.0
    %881 = vmatpush.msra.mxu0 0.0
    %882 = vmatpush.msra.mxu0 0.0
    %883 = vmatpush.msra.mxu0 0.0
    %884 = vmatpush.msra.mxu0 0.0
    %885 = vmatpush.msra.mxu0 %v865
    %886 = vmatmul.f32.gmra.mxu0 %v868
    %v887 = vpop.f32.mrf.mxu0
    %v888 = vadd.f32 0.0, %v887
    %889 = vdwg.mxu0
    %890 = vrot.lane.b32.xlu0 %v817, 112
    %v891 = vpop.permute.xlu0 %890
    %892 = vrot.lane.b32.xlu0 %v817, 80
    %v893 = vpop.permute.xlu0 %892
    %v894 = vsel %vm171, %v891, 0
    %v896 = vsel %vm171, %v893, 0
    %898 = vmatpush.xpose.msra.mxu0 0.0
    %899 = vmatpush.xpose.msra.mxu0 0.0
    %900 = vmatpush.xpose.msra.mxu0 0.0
    %901 = vmatpush.xpose.msra.mxu0 0.0
    %902 = vmatpush.xpose.msra.mxu0 0.0
    %903 = vmatpush.xpose.msra.mxu0 0.0
    %904 = vmatpush.xpose.msra.mxu0 0.0
    %905 = vmatpush.xpose.msra.mxu0 0.0
    %906 = vmatpush.xpose.msra.mxu0 0.0
    %907 = vmatpush.xpose.msra.mxu0 0.0
    %908 = vmatpush.xpose.msra.mxu0 0.0
    %909 = vmatpush.xpose.msra.mxu0 0.0
    %910 = vmatpush.xpose.msra.mxu0 0.0
    %911 = vmatpush.xpose.msra.mxu0 0.0
    %912 = vmatpush.xpose.msra.mxu0 0.0
    %913 = vmatpush.xpose.msra.mxu0 %v896
    %914 = vmatmul.f32.gmra.mxu0 %v894
    %v915 = vpop.f32.mrf.mxu0
    %v916 = vadd.f32 0.0, %v915
    %917 = vdwg.mxu0
    %v918 = vmul.f32 %v916, 0.25
    %v919 = vadd.f32 %v918, %v197
    %s920 = scalar_lea.vmem %s8, 40
    %921 = vst.msk [vmem:[%s920] sm:$0xff] %vm199, %v919
    %v922 = vsel %vm199, %v919, -inf
    %923 = vmax.xlane.f32.xlu0 %v922
    %v924 = vpop.xlane.xlu0 %923
    %v925 = vsub.f32 %v919, %v924
    %v926 = vmul.f32 %v925, 1.442695
    %v927 = vpow.pop %v926
    %v928 = vsel %vm199, %v927, 0.0
    %929 = vadd.xlane.f32.xlu0 %v928
    %v930 = vpop.xlane.xlu0 %929
    %v931 = vrcp.pop %v930
    %v932 = vmul.f32 %v927, %v931
    %933 = vrot.lane.b32.xlu0 %v817, 48
    %v934 = vpop.permute.xlu0 %933
    %v937 = vsel %vm199, %v932, 0
    %939 = vmatpush.msra.mxu0 0.0
    %940 = vmatpush.msra.mxu0 0.0
    %941 = vmatpush.msra.mxu0 0.0
    %942 = vmatpush.msra.mxu0 0.0
    %943 = vmatpush.msra.mxu0 0.0
    %944 = vmatpush.msra.mxu0 0.0
    %945 = vmatpush.msra.mxu0 0.0
    %946 = vmatpush.msra.mxu0 0.0
    %947 = vmatpush.msra.mxu0 0.0
    %948 = vmatpush.msra.mxu0 0.0
    %949 = vmatpush.msra.mxu0 0.0
    %950 = vmatpush.msra.mxu0 0.0
    %951 = vmatpush.msra.mxu0 0.0
    %952 = vmatpush.msra.mxu0 0.0
    %953 = vmatpush.msra.mxu0 0.0
    %954 = vmatpush.msra.mxu0 %v934
    %955 = vmatmul.f32.gmra.mxu0 %v937
    %v956 = vpop.f32.mrf.mxu0
    %v957 = vadd.f32 0.0, %v956
    %958 = vdwg.mxu0
    %960 = vrot.lane.b32.xlu0 %v957, 16
    %v961 = vpop.permute.xlu0 %960
    %v963 = vsel %vm171, %v888, %v961
    %965 = vrot.lane.b32.xlu0 %v820, 96
    %v966 = vpop.permute.xlu0 %965
    %v967 = vsel %vm171, %v820, 0
    %v969 = vsel %vm171, %v966, 0
    %971 = vmatpush.xpose.msra.mxu0 0.0
    %972 = vmatpush.xpose.msra.mxu0 0.0
    %973 = vmatpush.xpose.msra.mxu0 0.0
    %974 = vmatpush.xpose.msra.mxu0 0.0
    %975 = vmatpush.xpose.msra.mxu0 0.0
    %976 = vmatpush.xpose.msra.mxu0 0.0
    %977 = vmatpush.xpose.msra.mxu0 0.0
    %978 = vmatpush.xpose.msra.mxu0 0.0
    %979 = vmatpush.xpose.msra.mxu0 0.0
    %980 = vmatpush.xpose.msra.mxu0 0.0
    %981 = vmatpush.xpose.msra.mxu0 0.0
    %982 = vmatpush.xpose.msra.mxu0 0.0
    %983 = vmatpush.xpose.msra.mxu0 0.0
    %984 = vmatpush.xpose.msra.mxu0 0.0
    %985 = vmatpush.xpose.msra.mxu0 0.0
    %986 = vmatpush.xpose.msra.mxu0 %v969
    %987 = vmatmul.f32.gmra.mxu0 %v967
    %v988 = vpop.f32.mrf.mxu0
    %v989 = vadd.f32 0.0, %v988
    %990 = vdwg.mxu0
    %v991 = vmul.f32 %v989, 0.25
    %v992 = vadd.f32 %v991, %v340
    %s993 = scalar_lea.vmem %s8, 48
    %994 = vst.msk [vmem:[%s993] sm:$0xff] %vm199, %v992
    %v995 = vsel %vm199, %v992, -inf
    %996 = vmax.xlane.f32.xlu0 %v995
    %v997 = vpop.xlane.xlu0 %996
    %v998 = vsub.f32 %v992, %v997
    %v999 = vmul.f32 %v998, 1.442695
    %v1000 = vpow.pop %v999
    %v1001 = vsel %vm199, %v1000, 0.0
    %1002 = vadd.xlane.f32.xlu0 %v1001
    %v1003 = vpop.xlane.xlu0 %1002
    %v1004 = vrcp.pop %v1003
    %v1005 = vmul.f32 %v1000, %v1004
    %1006 = vrot.lane.b32.xlu0 %v820, 64
    %v1007 = vpop.permute.xlu0 %1006
    %v1010 = vsel %vm199, %v1005, 0
    %1012 = vmatpush.msra.mxu0 0.0
    %1013 = vmatpush.msra.mxu0 0.0
    %1014 = vmatpush.msra.mxu0 0.0
    %1015 = vmatpush.msra.mxu0 0.0
    %1016 = vmatpush.msra.mxu0 0.0
    %1017 = vmatpush.msra.mxu0 0.0
    %1018 = vmatpush.msra.mxu0 0.0
    %1019 = vmatpush.msra.mxu0 0.0
    %1020 = vmatpush.msra.mxu0 0.0
    %1021 = vmatpush.msra.mxu0 0.0
    %1022 = vmatpush.msra.mxu0 0.0
    %1023 = vmatpush.msra.mxu0 0.0
    %1024 = vmatpush.msra.mxu0 0.0
    %1025 = vmatpush.msra.mxu0 0.0
    %1026 = vmatpush.msra.mxu0 0.0
    %1027 = vmatpush.msra.mxu0 %v1007
    %1028 = vmatmul.f32.gmra.mxu0 %v1010
    %v1029 = vpop.f32.mrf.mxu0
    %v1030 = vadd.f32 0.0, %v1029
    %1031 = vdwg.mxu0
    %1032 = vrot.lane.b32.xlu0 %v820, 112
    %v1033 = vpop.permute.xlu0 %1032
    %1034 = vrot.lane.b32.xlu0 %v820, 80
    %v1035 = vpop.permute.xlu0 %1034
    %v1036 = vsel %vm171, %v1033, 0
    %v1038 = vsel %vm171, %v1035, 0
    %1040 = vmatpush.xpose.msra.mxu0 0.0
    %1041 = vmatpush.xpose.msra.mxu0 0.0
    %1042 = vmatpush.xpose.msra.mxu0 0.0
    %1043 = vmatpush.xpose.msra.mxu0 0.0
    %1044 = vmatpush.xpose.msra.mxu0 0.0
    %1045 = vmatpush.xpose.msra.mxu0 0.0
    %1046 = vmatpush.xpose.msra.mxu0 0.0
    %1047 = vmatpush.xpose.msra.mxu0 0.0
    %1048 = vmatpush.xpose.msra.mxu0 0.0
    %1049 = vmatpush.xpose.msra.mxu0 0.0
    %1050 = vmatpush.xpose.msra.mxu0 0.0
    %1051 = vmatpush.xpose.msra.mxu0 0.0
    %1052 = vmatpush.xpose.msra.mxu0 0.0
    %1053 = vmatpush.xpose.msra.mxu0 0.0
    %1054 = vmatpush.xpose.msra.mxu0 0.0
    %1055 = vmatpush.xpose.msra.mxu0 %v1038
    %1056 = vmatmul.f32.gmra.mxu0 %v1036
    %v1057 = vpop.f32.mrf.mxu0
    %v1058 = vadd.f32 0.0, %v1057
    %1059 = vdwg.mxu0
    %v1060 = vmul.f32 %v1058, 0.25
    %v1061 = vadd.f32 %v1060, %v340
    %s1062 = scalar_lea.vmem %s8, 56
    %1063 = vst.msk [vmem:[%s1062] sm:$0xff] %vm199, %v1061
    %v1064 = vsel %vm199, %v1061, -inf
    %1065 = vmax.xlane.f32.xlu0 %v1064
    %v1066 = vpop.xlane.xlu0 %1065
    %v1067 = vsub.f32 %v1061, %v1066
    %v1068 = vmul.f32 %v1067, 1.442695
    %v1069 = vpow.pop %v1068
    %v1070 = vsel %vm199, %v1069, 0.0
    %1071 = vadd.xlane.f32.xlu0 %v1070
    %v1072 = vpop.xlane.xlu0 %1071
    %v1073 = vrcp.pop %v1072
    %v1074 = vmul.f32 %v1069, %v1073
    %1075 = vrot.lane.b32.xlu0 %v820, 48
    %v1076 = vpop.permute.xlu0 %1075
    %v1079 = vsel %vm199, %v1074, 0
    %1081 = vmatpush.msra.mxu0 0.0
    %1082 = vmatpush.msra.mxu0 0.0
    %1083 = vmatpush.msra.mxu0 0.0
    %1084 = vmatpush.msra.mxu0 0.0
    %1085 = vmatpush.msra.mxu0 0.0
    %1086 = vmatpush.msra.mxu0 0.0
    %1087 = vmatpush.msra.mxu0 0.0
    %1088 = vmatpush.msra.mxu0 0.0
    %1089 = vmatpush.msra.mxu0 0.0
    %1090 = vmatpush.msra.mxu0 0.0
    %1091 = vmatpush.msra.mxu0 0.0
    %1092 = vmatpush.msra.mxu0 0.0
    %1093 = vmatpush.msra.mxu0 0.0
    %1094 = vmatpush.msra.mxu0 0.0
    %1095 = vmatpush.msra.mxu0 0.0
    %1096 = vmatpush.msra.mxu0 %v1076
    %1097 = vmatmul.f32.gmra.mxu0 %v1079
    %v1098 = vpop.f32.mrf.mxu0
    %v1099 = vadd.f32 0.0, %v1098
    %1100 = vdwg.mxu0
    %1102 = vrot.lane.b32.xlu0 %v1099, 16
    %v1103 = vpop.permute.xlu0 %1102
    %v1105 = vsel %vm171, %v1030, %v1103
    %s1106 = scalar_lea.vmem %s4, 32
    %v1107 = vld [vmem:[%s1106] sm:$0xff]
    %v1108 = vld [vmem:[%s1106 + $0x8] sm:$0xff]
    %v1109 = vld [vmem:[%s1106 + $0x10] sm:$0xff]
    %v1110 = vld [vmem:[%s1106 + $0x18] sm:$0xff]
    %v1111 = vperm.slane %v786, 0
    %v1113 = vsel %vm39, %v963, 0
    %v1116 = vsel %vm39, %v1105, 0
    %1118 = vmatpush.msra.mxu0 0.0
    %1119 = vmatpush.msra.mxu0 0.0
    %1120 = vmatpush.msra.mxu0 0.0
    %1121 = vmatpush.msra.mxu0 0.0
    %1122 = vmatpush.msra.mxu0 0.0
    %1123 = vmatpush.msra.mxu0 0.0
    %1124 = vmatpush.msra.mxu0 0.0
    %1125 = vmatpush.msra.mxu0 0.0
    %1126 = vmatpush.msra.mxu0 0.0
    %1127 = vmatpush.msra.mxu0 0.0
    %1128 = vmatpush.msra.mxu0 0.0
    %1129 = vmatpush.msra.mxu0 0.0
    %1130 = vmatpush.msra.mxu0 %v1110
    %1131 = vmatpush.msra.mxu0 %v1109
    %1132 = vmatpush.msra.mxu0 %v1108
    %1133 = vmatpush.msra.mxu0 %v1107
    %1134 = vmatmul.f32.gmra.mxu0 %v1113
    %v1135 = vpop.f32.mrf.mxu0
    %v1136 = vadd.f32 %v1111, %v1135
    %1137 = vmatmul.f32.gmra.mxu0 %v1116
    %v1138 = vpop.f32.mrf.mxu0
    %v1139 = vadd.f32 %v1111, %v1138
    %1140 = vdwg.mxu0
    %v1141 = vadd.f32 %v1136, %v752
    %v1142 = vadd.f32 %v1139, %v753
    %v1143 = vsel %vm39, %v1141, 0.0
    %1144 = vadd.xlane.f32.xlu0 %v1143
    %v1145 = vpop.xlane.xlu0 %1144
    %v1146 = vsel %vm39, %v1142, 0.0
    %1147 = vadd.xlane.f32.xlu0 %v1146
    %v1148 = vpop.xlane.xlu0 %1147
    %v1149 = vmul.f32 %v1145, %v52
    %v1150 = vmul.f32 %v1148, %v52
    %v1151 = vsub.f32 %v1141, %v1149
    %v1152 = vsub.f32 %v1142, %v1150
    %v1153 = vmul.f32 %v1151, %v1151
    %v1154 = vmul.f32 %v1152, %v1152
    %v1155 = vsel %vm39, %v1153, 0.0
    %1156 = vadd.xlane.f32.xlu0 %v1155
    %v1157 = vpop.xlane.xlu0 %1156
    %v1158 = vsel %vm39, %v1154, 0.0
    %1159 = vadd.xlane.f32.xlu0 %v1158
    %v1160 = vpop.xlane.xlu0 %1159
    %v1161 = vmul.f32 %v1157, %v52
    %v1162 = vmul.f32 %v1160, %v52
    %v1163 = vadd.f32 %v1161, 1e-12
    %v1164 = vadd.f32 %v1162, 1e-12
    %v1165 = vrsqrt.pop %v1163
    %v1166 = vmul.f32 %v1165, %v1163
    %v1167 = vmul.f32 %v1166, %v1165
    %v1168 = vmul.f32 0.5, %v1167
    %v1169 = vsub.f32 1.5, %v1168
    %v1170 = vmul.f32 %v1165, %v1169
    %vm1171 = vweird.f32 %v1163
    %vm1172 = vweird.f32 %v1165
    %vm1173 = vmor %vm1171, %vm1172
    %v1174 = vsel %vm1173, %v1165, %v1170
    %v1175 = vrsqrt.pop %v1164
    %v1176 = vmul.f32 %v1175, %v1164
    %v1177 = vmul.f32 %v1176, %v1175
    %v1178 = vmul.f32 0.5, %v1177
    %v1179 = vsub.f32 1.5, %v1178
    %v1180 = vmul.f32 %v1175, %v1179
    %vm1181 = vweird.f32 %v1164
    %vm1182 = vweird.f32 %v1175
    %vm1183 = vmor %vm1181, %vm1182
    %v1184 = vsel %vm1183, %v1175, %v1180
    %v1185 = vmul.f32 %v1151, %v1174
    %v1186 = vmul.f32 %v1152, %v1184
    %v1187 = vperm.slane %v787, 0
    %v1188 = vmul.f32 %v1185, %v1187
    %v1189 = vmul.f32 %v1186, %v1187
    %v1190 = vperm.slane %v788, 0
    %v1191 = vadd.f32 %v1188, %v1190
    %v1192 = vadd.f32 %v1189, %v1190
    %s1193 = scalar_lea.vmem %s5, 32
    %v1194 = vld [vmem:[%s1193] sm:$0xff]
    %v1195 = vld [vmem:[%s1193 + $0x8] sm:$0xff]
    %v1196 = vld [vmem:[%s1193 + $0x10] sm:$0xff]
    %v1197 = vld [vmem:[%s1193 + $0x18] sm:$0xff]
    %v1198 = vperm.slane %v789, 0
    %v1200 = vsel %vm39, %v1191, 0
    %v1203 = vsel %vm39, %v1192, 0
    %1205 = vmatpush.msra.mxu0 0.0
    %1206 = vmatpush.msra.mxu0 0.0
    %1207 = vmatpush.msra.mxu0 0.0
    %1208 = vmatpush.msra.mxu0 0.0
    %1209 = vmatpush.msra.mxu0 0.0
    %1210 = vmatpush.msra.mxu0 0.0
    %1211 = vmatpush.msra.mxu0 0.0
    %1212 = vmatpush.msra.mxu0 0.0
    %1213 = vmatpush.msra.mxu0 0.0
    %1214 = vmatpush.msra.mxu0 0.0
    %1215 = vmatpush.msra.mxu0 0.0
    %1216 = vmatpush.msra.mxu0 0.0
    %1217 = vmatpush.msra.mxu0 %v1197
    %1218 = vmatpush.msra.mxu0 %v1196
    %1219 = vmatpush.msra.mxu0 %v1195
    %1220 = vmatpush.msra.mxu0 %v1194
    %1221 = vmatmul.f32.gmra.mxu0 %v1200
    %v1222 = vpop.f32.mrf.mxu0
    %v1223 = vadd.f32 %v1198, %v1222
    %1224 = vmatmul.f32.gmra.mxu0 %v1203
    %v1225 = vpop.f32.mrf.mxu0
    %v1226 = vadd.f32 %v1198, %v1225
    %1227 = vdwg.mxu0
    %v1228 = vmul.f32 %v1223, 0.5
    %v1229 = vmul.f32 %v1226, 0.5
    %v1230 = vmul.f32 %v1223, 0.70710677
    %v1231 = vmul.f32 %v1226, 0.70710677
    %v1232 = vmul.f32 %v1230, %v1230
    %v1233 = vmin.f32 16.0, %v1232
    %v1234 = vmul.f32 %v1233, 2.1237322e-06
    %v1235 = vadd.f32 %v1234, 0.00028619796
    %v1236 = vmul.f32 %v1233, %v1235
    %v1237 = vadd.f32 %v1236, 0.0036580483
    %v1238 = vmul.f32 %v1233, %v1237
    %v1239 = vadd.f32 %v1238, 0.05243302
    %v1240 = vmul.f32 %v1233, %v1239
    %v1241 = vadd.f32 %v1240, 0.18741608
    %v1242 = vmul.f32 %v1233, %v1241
    %v1243 = vadd.f32 %v1242, 1.1283791
    %v1244 = vmul.f32 %v1230, %v1243
    %v1245 = vmul.f32 %v1233, 3.8918573e-05
    %v1246 = vadd.f32 %v1245, 0.001143296
    %v1247 = vmul.f32 %v1233, %v1246
    %v1248 = vadd.f32 %v1247, 0.014752088
    %v1249 = vmul.f32 %v1233, %v1248
    %v1250 = vadd.f32 %v1249, 0.112945676
    %v1251 = vmul.f32 %v1233, %v1250
    %v1252 = vadd.f32 %v1251, 0.4994258
    %v1253 = vmul.f32 %v1233, %v1252
    %v1254 = vadd.f32 %v1253, 1.0
    %v1255 = vrcp.pop %v1254
    %v1256 = vmul.f32 %v1254, %v1255
    %v1257 = vsub.f32 1.0, %v1256
    %v1258 = vmul.f32 %v1255, %v1257
    %v1259 = vadd.f32 %v1255, %v1258
    %vm1260 = vweird.f32 %v1254
    %vm1261 = vweird.f32 %v1255
    %vm1262 = vmor %vm1260, %vm1261
    %v1263 = vsel %vm1262, %v1255, %v1259
    %v1264 = vand.u32 2147483647, %v1254
    %vm1265 = vcmp.eq.f32.partialorder %v1264, 8.507059e+37
    %v1266 = vand.u32 %v1254, 2147483648
    %v1267 = vor.u32 1.1754944e-38, %v1266
    %v1268 = vsel %vm1265, %v1267, %v1263
    %v1269 = vmul.f32 %v1244, %v1268
    %v1270 = vmin.f32 %v1269, 1.0
    %v1271 = vmax.f32 %v1270, -1.0
    %v1272 = vmul.f32 %v1231, %v1231
    %v1273 = vmin.f32 16.0, %v1272
    %v1274 = vmul.f32 %v1273, 2.1237322e-06
    %v1275 = vadd.f32 %v1274, 0.00028619796
    %v1276 = vmul.f32 %v1273, %v1275
    %v1277 = vadd.f32 %v1276, 0.0036580483
    %v1278 = vmul.f32 %v1273, %v1277
    %v1279 = vadd.f32 %v1278, 0.05243302
    %v1280 = vmul.f32 %v1273, %v1279
    %v1281 = vadd.f32 %v1280, 0.18741608
    %v1282 = vmul.f32 %v1273, %v1281
    %v1283 = vadd.f32 %v1282, 1.1283791
    %v1284 = vmul.f32 %v1231, %v1283
    %v1285 = vmul.f32 %v1273, 3.8918573e-05
    %v1286 = vadd.f32 %v1285, 0.001143296
    %v1287 = vmul.f32 %v1273, %v1286
    %v1288 = vadd.f32 %v1287, 0.014752088
    %v1289 = vmul.f32 %v1273, %v1288
    %v1290 = vadd.f32 %v1289, 0.112945676
    %v1291 = vmul.f32 %v1273, %v1290
    %v1292 = vadd.f32 %v1291, 0.4994258
    %v1293 = vmul.f32 %v1273, %v1292
    %v1294 = vadd.f32 %v1293, 1.0
    %v1295 = vrcp.pop %v1294
    %v1296 = vmul.f32 %v1294, %v1295
    %v1297 = vsub.f32 1.0, %v1296
    %v1298 = vmul.f32 %v1295, %v1297
    %v1299 = vadd.f32 %v1295, %v1298
    %vm1300 = vweird.f32 %v1294
    %vm1301 = vweird.f32 %v1295
    %vm1302 = vmor %vm1300, %vm1301
    %v1303 = vsel %vm1302, %v1295, %v1299
    %v1304 = vand.u32 2147483647, %v1294
    %vm1305 = vcmp.eq.f32.partialorder %v1304, 8.507059e+37
    %v1306 = vand.u32 %v1294, 2147483648
    %v1307 = vor.u32 1.1754944e-38, %v1306
    %v1308 = vsel %vm1305, %v1307, %v1303
    %v1309 = vmul.f32 %v1284, %v1308
    %v1310 = vmin.f32 %v1309, 1.0
    %v1311 = vmax.f32 %v1310, -1.0
    %v1312 = vadd.f32 %v1271, 1.0
    %v1313 = vadd.f32 %v1311, 1.0
    %v1314 = vmul.f32 %v1228, %v1312
    %v1315 = vmul.f32 %v1229, %v1313
    %s1316 = scalar_lea.vmem %s6, 64
    %v1317 = vld [vmem:[%s1316] sm:$0xff]
    %v1318 = vld [vmem:[%s1316 + $0x8] sm:$0xff]
    %v1319 = vld [vmem:[%s1316 + $0x10] sm:$0xff]
    %v1320 = vld [vmem:[%s1316 + $0x18] sm:$0xff]
    %v1321 = vld [vmem:[%s1316 + $0x20] sm:$0xff]
    %v1322 = vld [vmem:[%s1316 + $0x28] sm:$0xff]
    %v1323 = vld [vmem:[%s1316 + $0x30] sm:$0xff]
    %v1324 = vld [vmem:[%s1316 + $0x38] sm:$0xff]
    %v1325 = vperm.slane %v790, 0
    %v1327 = vsel %vm672, %v1314, 0
    %v1330 = vsel %vm672, %v1315, 0
    %1332 = vmatpush.msra.mxu0 0.0
    %1333 = vmatpush.msra.mxu0 0.0
    %1334 = vmatpush.msra.mxu0 0.0
    %1335 = vmatpush.msra.mxu0 0.0
    %1336 = vmatpush.msra.mxu0 0.0
    %1337 = vmatpush.msra.mxu0 0.0
    %1338 = vmatpush.msra.mxu0 0.0
    %1339 = vmatpush.msra.mxu0 0.0
    %1340 = vmatpush.msra.mxu0 %v1324
    %1341 = vmatpush.msra.mxu0 %v1323
    %1342 = vmatpush.msra.mxu0 %v1322
    %1343 = vmatpush.msra.mxu0 %v1321
    %1344 = vmatpush.msra.mxu0 %v1320
    %1345 = vmatpush.msra.mxu0 %v1319
    %1346 = vmatpush.msra.mxu0 %v1318
    %1347 = vmatpush.msra.mxu0 %v1317
    %1348 = vmatmul.f32.gmra.mxu0 %v1327
    %v1349 = vpop.f32.mrf.mxu0
    %v1350 = vadd.f32 %v1325, %v1349
    %1351 = vmatmul.f32.gmra.mxu0 %v1330
    %v1352 = vpop.f32.mrf.mxu0
    %v1353 = vadd.f32 %v1325, %v1352
    %1354 = vdwg.mxu0
    %v1355 = vadd.f32 %v1350, %v1191
    %v1356 = vadd.f32 %v1353, %v1192
    %v1357 = vsel %vm39, %v1355, 0.0
    %1358 = vadd.xlane.f32.xlu0 %v1357
    %v1359 = vpop.xlane.xlu0 %1358
    %v1360 = vsel %vm39, %v1356, 0.0
    %1361 = vadd.xlane.f32.xlu0 %v1360
    %v1362 = vpop.xlane.xlu0 %1361
    %v1363 = vmul.f32 %v1359, %v52
    %v1364 = vmul.f32 %v1362, %v52
    %v1365 = vsub.f32 %v1355, %v1363
    %v1366 = vsub.f32 %v1356, %v1364
    %v1367 = vmul.f32 %v1365, %v1365
    %v1368 = vmul.f32 %v1366, %v1366
    %v1369 = vsel %vm39, %v1367, 0.0
    %1370 = vadd.xlane.f32.xlu0 %v1369
    %v1371 = vpop.xlane.xlu0 %1370
    %v1372 = vsel %vm39, %v1368, 0.0
    %1373 = vadd.xlane.f32.xlu0 %v1372
    %v1374 = vpop.xlane.xlu0 %1373
    %v1375 = vmul.f32 %v1371, %v52
    %v1376 = vmul.f32 %v1374, %v52
    %v1377 = vadd.f32 %v1375, 1e-12
    %v1378 = vadd.f32 %v1376, 1e-12
    %v1379 = vrsqrt.pop %v1377
    %v1380 = vmul.f32 %v1379, %v1377
    %v1381 = vmul.f32 %v1380, %v1379
    %v1382 = vmul.f32 0.5, %v1381
    %v1383 = vsub.f32 1.5, %v1382
    %v1384 = vmul.f32 %v1379, %v1383
    %vm1385 = vweird.f32 %v1377
    %vm1386 = vweird.f32 %v1379
    %vm1387 = vmor %vm1385, %vm1386
    %v1388 = vsel %vm1387, %v1379, %v1384
    %v1389 = vrsqrt.pop %v1378
    %v1390 = vmul.f32 %v1389, %v1378
    %v1391 = vmul.f32 %v1390, %v1389
    %v1392 = vmul.f32 0.5, %v1391
    %v1393 = vsub.f32 1.5, %v1392
    %v1394 = vmul.f32 %v1389, %v1393
    %vm1395 = vweird.f32 %v1378
    %vm1396 = vweird.f32 %v1389
    %vm1397 = vmor %vm1395, %vm1396
    %v1398 = vsel %vm1397, %v1389, %v1394
    %v1399 = vmul.f32 %v1365, %v1388
    %v1400 = vmul.f32 %v1366, %v1398
    %v1401 = vperm.slane %v791, 0
    %v1402 = vmul.f32 %v1399, %v1401
    %v1403 = vmul.f32 %v1400, %v1401
    %v1404 = vperm.slane %v792, 0
    %v1405 = vadd.f32 %v1402, %v1404
    %v1406 = vadd.f32 %v1403, %v1404
    %v1408 = vsel %vm39, %v1405, 0
    %v1411 = vsel %vm39, %v1406, 0
    %1413 = vmatpush.msra.mxu0 0.0
    %1414 = vmatpush.msra.mxu0 0.0
    %1415 = vmatpush.msra.mxu0 0.0
    %1416 = vmatpush.msra.mxu0 0.0
    %1417 = vmatpush.msra.mxu0 0.0
    %1418 = vmatpush.msra.mxu0 0.0
    %1419 = vmatpush.msra.mxu0 0.0
    %1420 = vmatpush.msra.mxu0 0.0
    %1421 = vmatpush.msra.mxu0 0.0
    %1422 = vmatpush.msra.mxu0 0.0
    %1423 = vmatpush.msra.mxu0 0.0
    %1424 = vmatpush.msra.mxu0 0.0
    %1425 = vmatpush.msra.mxu0 %v33
    %1426 = vmatpush.msra.mxu0 %v32
    %1427 = vmatpush.msra.mxu0 %v31
    %1428 = vmatpush.msra.mxu0 %v30
    %1429 = vmatmul.f32.gmra.mxu0 %v1408
    %v1430 = vpop.f32.mrf.mxu0
    %v1431 = vadd.f32 %v97, %v1430
    %1432 = vmatmul.f32.gmra.mxu0 %v1411
    %v1433 = vpop.f32.mrf.mxu0
    %v1434 = vadd.f32 %v97, %v1433
    %1435 = vdwg.mxu0
    %1436 = vst.msk [vmem:[%s9 + $0x20] sm:$0xff] %vm127, %v1431
    %1437 = vst.msk [vmem:[%s9 + $0x28] sm:$0xff] %vm127, %v1434
    %1438 = vst.msk [vmem:[#allocation2] sm:$0xff] %vm39, %v1405
    %1439 = vst.msk [vmem:[#allocation2 + $0x8] sm:$0xff] %vm39, %v1406
    // Predicated region
    $region30: #{run.1} parent=1 // pred_check
      _
    $region31: #{run.1} parent=1 // pred_check_branch
      %1441 = sbr.rel (0) target = $region33
    $region32: #{run.1} parent=1 // pred_region
      %1443 = vsyncadd [#allocation3], 0
      %s1444 = sshll.u32 [#allocation2], 4
      %s1445 = int_to_ptr.vmem [resolvable:$true] %s1444
      %s1446 = sshll.u32 %s7, 4
      %s1447 = int_to_ptr.hbm [resolvable:$true] %s1446
      %1452 = dma.vmem_to_hbm [thread:$0]  %s1445, 256, %s1447, [#allocation3], 128, 128, 8
    $region33: #{run.1} parent=1 // pred_fallthru
      _
    // Predicated region
    $region34: #{run.1} parent=1 // pred_check
      _
    $region35: #{run.1} parent=1 // pred_check_branch
      %1454 = sbr.rel (0) target = $region37
    $region36: #{run.1} parent=1 // pred_region
      _
    $region37: #{run.1} parent=1 // pred_fallthru
      _
    // Predicated region
    $region38: #{run.1} parent=1 // pred_check
      _
    $region39: #{run.1} parent=1 // pred_check_branch
      %1456 = sbr.rel (0) target = $region41
    $region40: #{run.1} parent=1 // pred_region
      _
    $region41: #{run.1} parent=1 // pred_fallthru
      _
    // Predicated region
    $region42: #{run.1} parent=1 // pred_check
      _
    $region43: #{run.1} parent=1 // pred_check_branch
      %1458 = sbr.rel (0) target = $region45
    $region44: #{run.1} parent=1 // pred_region
      %1460 = dma.done [#allocation3], 256
    $region45: #{run.1} parent=1 // pred_fallthru
      _
    // Predicated region
    $region46: #{run.1} parent=1 // pred_check
      _
    $region47: #{run.1} parent=1 // pred_check_branch
      %1462 = sbr.rel (0) target = $region49
    $region48: #{run.1} parent=1 // pred_region
      _
    $region49: #{run.1} parent=1 // pred_fallthru
      _
    // Predicated region
    $region50: #{run.1} parent=1 // pred_check
      _
    $region51: #{run.1} parent=1 // pred_check_branch
      %1464 = sbr.rel (0) target = $region53
    $region52: #{run.1} parent=1 // pred_region
      _
    $region53: #{run.1} parent=1 // pred_fallthru
      _
    %1465 = vsyncpa [#allocation3], 1

</llo_original>
